<compile_context>
chip_gen: v7x
topology: tpu7x:2x2x1
jax: 0.10.0
libtpu: 0.0.40
codegen_flags: <defaults>
</compile_context>

<pallas_src>
import functools

import jax
import jax.numpy as jnp
from jax.experimental import pallas as pl
from jax.experimental.pallas import tpu as pltpu

# ----------------------------- config (small, synthetic) -----------------------------
VOCAB = 128
MAX_POS = 16
DIM = 32          # hidden size  ("base.config.dim")
N_HEADS = 4
HIDDEN = 64       # FFN inner size
N_LAYERS = 2
BATCH = 2
SEQ = 8
LN_EPS = 1e-12
OUT_LANES = 128   # lane-dense output slab width


# ----------------------------- in-kernel helpers -----------------------------
def _layernorm(x, gamma, beta):
    mu = jnp.mean(x, axis=-1, keepdims=True)
    var = jnp.mean((x - mu) ** 2, axis=-1, keepdims=True)
    return (x - mu) * jax.lax.rsqrt(var + LN_EPS) * gamma + beta


def _gelu(x):
    # TODO(synk): HF DistilBERT uses exact erf-GELU; tanh approximation used here for
    # guaranteed Mosaic lowering (numerically ~1e-3 close, weights are synthetic anyway).
    c = 0.7978845608028654  # sqrt(2/pi)
    return 0.5 * x * (1.0 + jnp.tanh(c * (x + 0.044715 * x * x * x)))


# ----------------------------- fused forward kernel -----------------------------
def fused_forward_kernel(emb_ref, bias_ref, embln_ref, attnw_ref, bqkv_ref,
                         w1s_ref, w2s_ref, vecs_ref, bf1s_ref, hw_ref, hb_ref,
                         out_ref, *, num_heads, n_layers, batch, seq):
    f32 = jnp.float32
    bf16 = jnp.bfloat16
    bs, d = emb_ref.shape
    dh = d // num_heads

    # ---- embedding LayerNorm (word + position add was fused with the XLA gather) ----
    eln = embln_ref[...]                                     # (2, D): [gamma, beta]
    x = _layernorm(emb_ref[...], eln[0:1, :], eln[1:2, :])   # (BS, D) f32

    # ---- additive attention bias, hoisted out of the layer loop and tiled once to
    #      the head-stacked sublane layout (num_heads*BS, BS) ----
    bias = bias_ref[...]                                     # (BS, BS) f32
    bias_stk = jnp.concatenate([bias] * num_heads, axis=0)   # (H*BS, BS)

    # ---- transformer encoder layers (static unroll over n_layers) ----
    for li in range(n_layers):
        vl = vecs_ref[li]          # (6, D) f32: [bo, g_sa, b_sa, bf2, g_out, b_out]
        bo, g_sa, b_sa = vl[0:1], vl[1:2], vl[2:3]
        bf2, g_out, b_out = vl[3:4], vl[4:5], vl[5:6]
        wl = attnw_ref[li]         # (D, 4D) bf16: [Wq*scale | Wk | Wv | Wo]
        bqkv = bqkv_ref[li]        # (1, 3D) f32: [bq*scale, bk, bv]
        bf1 = bf1s_ref[li]         # (1, H) f32
        w1 = w1s_ref[li]           # (D, H) bf16
        w2 = w2s_ref[li]           # (H, D) bf16

        xb = x.astype(bf16)
        # one fused QKV matmul (1/sqrt(dh) already folded into Wq / bq)
        qkv = jnp.dot(xb, wl[:, :3 * d], preferred_element_type=f32) + bqkv  # (BS, 3D)
        q = qkv[:, 0 * d:1 * d]
        k = qkv[:, 1 * d:2 * d]
        v = qkv[:, 2 * d:3 * d]

        # per-head scores, stacked along the sublane axis so the softmax (mask add,
        # max, exp, sum, reciprocal) runs ONCE over the whole (H*BS, BS) slab
        s_parts = []
        for h in range(num_heads):
            lo = h * dh
            qh = q[:, lo:lo + dh].astype(bf16)
            kh = k[:, lo:lo + dh].astype(bf16)
            s_parts.append(jax.lax.dot_general(qh, kh, (((1,), (1,)), ((), ())),
                                               preferred_element_type=f32))   # (BS, BS)
        s = jnp.concatenate(s_parts, axis=0) + bias_stk                        # (H*BS, BS)
        s = s - jnp.max(s, axis=-1, keepdims=True)
        p = jnp.exp(s)
        # approx reciprocal on the EUP (~2^-12 rel. error vs exact divide)
        p = p * pl.reciprocal(jnp.sum(p, axis=-1, keepdims=True), approx=True)

        ctx_parts = []
        for h in range(num_heads):
            ph = p[h * bs:(h + 1) * bs, :].astype(bf16)
            vh = v[:, h * dh:(h + 1) * dh].astype(bf16)
            ctx_parts.append(jnp.dot(ph, vh, preferred_element_type=f32))
        ctx = jnp.concatenate(ctx_parts, axis=-1)                              # (BS, D)

        attn_out = jnp.dot(ctx.astype(bf16), wl[:, 3 * d:4 * d],
                           preferred_element_type=f32) + bo
        x1 = _layernorm(x + attn_out, g_sa, b_sa)

        h1 = _gelu(jnp.dot(x1.astype(bf16), w1, preferred_element_type=f32) + bf1)
        ffn = jnp.dot(h1.astype(bf16), w2, preferred_element_type=f32) + bf2
        x = _layernorm(x1 + ffn, g_out, b_out)

    # ---- classification head on the CLS row of every sequence (vectorized) ----
    hw = hw_ref[...]              # (1, D)  torch Linear(dim, 1).weight layout
    hb = hb_ref[...]              # (1, 1)
    # gather the CLS rows into one (B, D) block (static slices + one concat), one
    # reduction, one broadcast and ONE unmasked lane-dense store
    cls = jnp.concatenate([x[b * seq:b * seq + 1, :] for b in range(batch)], axis=0)
    scores = jnp.sum(cls * hw, axis=-1, keepdims=True) + hb                    # (B, 1)
    out_ref[...] = jnp.broadcast_to(scores, out_ref.shape)


# ----------------------------- pallas_call wrapper -----------------------------
def fused_forward(emb, bias, emb_ln, attn_w, bqkv, w1, w2, vecs, bf1, head_w, head_b,
                  *, batch, seq, num_heads, n_layers):
    kernel = functools.partial(fused_forward_kernel, num_heads=num_heads,
                               n_layers=n_layers, batch=batch, seq=seq)
    # Everything (packed bf16 weights ~48 KiB + tiny activations + one (BS,BS) bias)
    # fits in VMEM, so a single grid-less invocation with whole-array VMEM blocks is
    # used (no per-grid-step launch/DMA overhead, nothing for megacore to split here).
    # TODO(synk): at real DistilBERT sizes (D=768, H=3072, S>=128): stream per-layer
    # weights via a grid axis over L (or manual double-buffered DMA), K-tile the
    # FFN/attention matmuls with an f32 accumulator scratch, build the attention bias
    # in-kernel from a (BS,) key-mask vector (broadcasted_iota + compare) instead of
    # passing an O(BS^2) matrix, set CompilerParams(vmem_limit_bytes=...) explicitly
    # (v7x has 64 MiB VMEM), and add a "parallel" query-row grid axis so v7x's second
    # TensorCore is used.
    vmem = pl.BlockSpec(memory_space=pltpu.MemorySpace.VMEM)
    return pl.pallas_call(
        kernel,
        out_shape=jax.ShapeDtypeStruct((batch, OUT_LANES), jnp.float32),
        in_specs=[vmem] * 11,
        out_specs=vmem,
    )(emb, bias, emb_ln, attn_w, bqkv, w1, w2, vecs, bf1, head_w, head_b)


# ----------------------------- parameter init -----------------------------
def init_params(key):
    def nrm(k, shape):
        return 0.02 * jax.random.normal(k, shape, dtype=jnp.float32)

    keys = jax.random.split(key, 3 + N_LAYERS)
    ones_d = jnp.ones((1, DIM), jnp.float32)
    zeros_d = jnp.zeros((1, DIM), jnp.float32)
    attn_scale = 1.0 / float(DIM // N_HEADS) ** 0.5

    attn_w, bqkvs, w1s, w2s, vecs, bf1s = [], [], [], [], [], []
    for li in range(N_LAYERS):
        lk = jax.random.split(keys[3 + li], 6)
        wq = nrm(lk[0], (DIM, DIM)) * attn_scale          # fold 1/sqrt(dh) into Wq
        wk = nrm(lk[1], (DIM, DIM))
        wv = nrm(lk[2], (DIM, DIM))
        wo = nrm(lk[3], (DIM, DIM))
        attn_w.append(jnp.concatenate([wq, wk, wv, wo], axis=1))       # (D, 4D)
        # packed QKV bias [bq*scale, bk, bv] (all zero for the synthetic init)
        bqkvs.append(jnp.concatenate([zeros_d * attn_scale, zeros_d, zeros_d], axis=1))
        w1s.append(nrm(lk[4], (DIM, HIDDEN)))
        w2s.append(nrm(lk[5], (HIDDEN, DIM)))
        # packed small vectors: [bo, g_sa, b_sa, bf2, g_out, b_out]
        vecs.append(jnp.concatenate([zeros_d, ones_d, zeros_d,
                                     zeros_d, ones_d, zeros_d], axis=0))
        bf1s.append(jnp.zeros((1, HIDDEN), jnp.float32))

    return {
        "word_emb": nrm(keys[0], (VOCAB, DIM)),
        "pos_emb": nrm(keys[1], (MAX_POS, DIM)),
        "emb_ln": jnp.concatenate([ones_d, zeros_d], axis=0),     # (2, D): gamma, beta
        "attn_w": jnp.stack(attn_w).astype(jnp.bfloat16),         # (L, D, 4D): q k v o
        "bqkv": jnp.stack(bqkvs),                                 # (L, 1, 3D) f32
        "w1": jnp.stack(w1s).astype(jnp.bfloat16),                # (L, D, H)
        "w2": jnp.stack(w2s).astype(jnp.bfloat16),                # (L, H, D)
        "vecs": jnp.stack(vecs),                                  # (L, 6, D) f32
        "bf1": jnp.stack(bf1s),                                   # (L, 1, H) f32
        "head_w": nrm(keys[2], (1, DIM)),                         # torch Linear(dim,1).weight
        "head_b": jnp.zeros((1, 1), jnp.float32),
    }


# ----------------------------- full forward (Model.forward) -----------------------------
@jax.jit
def model_forward(params, input_ids, attention_mask):
    B, S = input_ids.shape
    D = params["word_emb"].shape[-1]
    BS = B * S

    # token gather + word/pos embedding add stay in XLA (they fuse with the gather);
    # everything downstream runs in ONE fused Pallas kernel on the flattened (BS, D) slab.
    emb = (params["word_emb"][input_ids].reshape(BS, D)
           + jnp.tile(params["pos_emb"][:S], (B, 1))).astype(jnp.float32)

    # Single additive attention-bias matrix, built once:
    #   0          where key is in the same sequence AND not padded
    #   finfo.min  otherwise (covers both HF masked_fill of padded keys and the
    #              block-diagonal structure of the flattened batch; finite value
    #              everywhere so a fully-masked row can never produce NaN)
    neg = jnp.finfo(jnp.float32).min
    batch_ids = jnp.repeat(jnp.arange(B, dtype=jnp.int32), S)
    same = batch_ids[:, None] == batch_ids[None, :]                 # (BS, BS)
    key_keep = (attention_mask.reshape(BS) != 0)[None, :]           # (1, BS)
    bias = jnp.where(same & key_keep, 0.0, neg).astype(jnp.float32)

    out_pad = fused_forward(emb, bias, params["emb_ln"],
                            params["attn_w"], params["bqkv"],
                            params["w1"], params["w2"],
                            params["vecs"], params["bf1"],
                            params["head_w"], params["head_b"],
                            batch=B, seq=S, num_heads=N_HEADS, n_layers=N_LAYERS)
    return out_pad[:, :1]                                           # (B, 1)


# ----------------------------- main -----------------------------
if __name__ == "__main__":
    key = jax.random.PRNGKey(0)
    k_param, k_ids = jax.random.split(key)

    params = init_params(k_param)
    input_ids = jax.random.randint(k_ids, (BATCH, SEQ), 0, VOCAB, dtype=jnp.int32)
    attention_mask = jnp.ones((BATCH, SEQ), dtype=jnp.int32)
    attention_mask = attention_mask.at[1, SEQ - 2:].set(0)   # exercise the masking path

    out = model_forward(params, input_ids, attention_mask)
    out = jax.block_until_ready(out)
    assert out.shape == (BATCH, 1) and out.dtype == jnp.float32
    assert bool(jnp.all(jnp.isfinite(out)))
    print("KERNEL_OK")
</pallas_src>

<mosaic_0001>
module attributes {stable_mosaic.version = 11 : i64} {
  func.func @fused_forward_kernel(%arg0: memref<16x32xf32, #tpu.memory_space<vmem>>, %arg1: memref<16x16xf32, #tpu.memory_space<vmem>>, %arg2: memref<2x32xf32, #tpu.memory_space<vmem>>, %arg3: memref<2x32x128xbf16, #tpu.memory_space<vmem>>, %arg4: memref<2x1x96xf32, #tpu.memory_space<vmem>>, %arg5: memref<2x32x64xbf16, #tpu.memory_space<vmem>>, %arg6: memref<2x64x32xbf16, #tpu.memory_space<vmem>>, %arg7: memref<2x6x32xf32, #tpu.memory_space<vmem>>, %arg8: memref<2x1x64xf32, #tpu.memory_space<vmem>>, %arg9: memref<1x32xf32, #tpu.memory_space<vmem>>, %arg10: memref<1x1xf32, #tpu.memory_space<vmem>>, %arg11: memref<2x128xf32, #tpu.memory_space<vmem>>) attributes {dimension_semantics = [], scalar_prefetch = 0 : i64, scratch_operands = 0 : i64, tpu.core_type = #tpu.core_type<tc>} {
    %c0 = arith.constant 0 : index
    %c0_0 = arith.constant 0 : index
    %0 = vector.load %arg2[%c0, %c0_0] : memref<2x32xf32, #tpu.memory_space<vmem>>, vector<2x32xf32>
    %c0_1 = arith.constant 0 : index
    %c0_2 = arith.constant 0 : index
    %1 = vector.load %arg0[%c0_1, %c0_2] : memref<16x32xf32, #tpu.memory_space<vmem>>, vector<16x32xf32>
    %2 = vector.extract_strided_slice %0 {offsets = [0, 0], sizes = [1, 32], strides = [1, 1]} : vector<2x32xf32> to vector<1x32xf32>
    %3 = vector.extract_strided_slice %0 {offsets = [1, 0], sizes = [1, 32], strides = [1, 1]} : vector<2x32xf32> to vector<1x32xf32>
    %cst = arith.constant dense<0.000000e+00> : vector<16xf32>
    %4 = vector.multi_reduction <add>, %1, %cst [1] : vector<16x32xf32> to vector<16xf32>
    %5 = vector.shape_cast %4 : vector<16xf32> to vector<16x1xf32>
    %cst_3 = arith.constant 3.200000e+01 : f32
    %6 = vector.broadcast %cst_3 : f32 to vector<16x1xf32>
    %7 = arith.divf %5, %6 : vector<16x1xf32>
    %8 = vector.broadcast %7 : vector<16x1xf32> to vector<16x32xf32>
    %9 = arith.subf %1, %8 : vector<16x32xf32>
    %10 = arith.mulf %9, %9 : vector<16x32xf32>
    %cst_4 = arith.constant dense<0.000000e+00> : vector<16xf32>
    %11 = vector.multi_reduction <add>, %10, %cst_4 [1] : vector<16x32xf32> to vector<16xf32>
    %12 = vector.shape_cast %11 : vector<16xf32> to vector<16x1xf32>
    %cst_5 = arith.constant 3.200000e+01 : f32
    %13 = vector.broadcast %cst_5 : f32 to vector<16x1xf32>
    %14 = arith.divf %12, %13 : vector<16x1xf32>
    %15 = vector.broadcast %7 : vector<16x1xf32> to vector<16x32xf32>
    %16 = arith.subf %1, %15 : vector<16x32xf32>
    %cst_6 = arith.constant 9.99999996E-13 : f32
    %17 = vector.broadcast %cst_6 : f32 to vector<16x1xf32>
    %18 = arith.addf %14, %17 : vector<16x1xf32>
    %19 = math.rsqrt %18 : vector<16x1xf32>
    %20 = vector.broadcast %19 : vector<16x1xf32> to vector<16x32xf32>
    %21 = arith.mulf %16, %20 : vector<16x32xf32>
    %22 = vector.broadcast %2 : vector<1x32xf32> to vector<16x32xf32>
    %23 = arith.mulf %21, %22 : vector<16x32xf32>
    %24 = vector.broadcast %3 : vector<1x32xf32> to vector<16x32xf32>
    %25 = arith.addf %23, %24 : vector<16x32xf32>
    %c0_7 = arith.constant 0 : index
    %c0_8 = arith.constant 0 : index
    %26 = vector.load %arg1[%c0_7, %c0_8] : memref<16x16xf32, #tpu.memory_space<vmem>>, vector<16x16xf32>
    %27 = tpu.concatenate %26, %26, %26, %26 in 0 : vector<16x16xf32>, vector<16x16xf32>, vector<16x16xf32>, vector<16x16xf32> -> vector<64x16xf32>
    %c0_9 = arith.constant 0 : index
    %c0_10 = arith.constant 0 : index
    %c0_11 = arith.constant 0 : index
    %28 = vector.load %arg7[%c0_9, %c0_10, %c0_11] : memref<2x6x32xf32, #tpu.memory_space<vmem>>, vector<1x6x32xf32>
    %29 = vector.shape_cast %28 : vector<1x6x32xf32> to vector<6x32xf32>
    %30 = vector.extract_strided_slice %29 {offsets = [0, 0], sizes = [1, 32], strides = [1, 1]} : vector<6x32xf32> to vector<1x32xf32>
    %31 = vector.extract_strided_slice %29 {offsets = [1, 0], sizes = [1, 32], strides = [1, 1]} : vector<6x32xf32> to vector<1x32xf32>
    %32 = vector.extract_strided_slice %29 {offsets = [2, 0], sizes = [1, 32], strides = [1, 1]} : vector<6x32xf32> to vector<1x32xf32>
    %33 = vector.extract_strided_slice %29 {offsets = [3, 0], sizes = [1, 32], strides = [1, 1]} : vector<6x32xf32> to vector<1x32xf32>
    %34 = vector.extract_strided_slice %29 {offsets = [4, 0], sizes = [1, 32], strides = [1, 1]} : vector<6x32xf32> to vector<1x32xf32>
    %35 = vector.extract_strided_slice %29 {offsets = [5, 0], sizes = [1, 32], strides = [1, 1]} : vector<6x32xf32> to vector<1x32xf32>
    %c0_12 = arith.constant 0 : index
    %c0_13 = arith.constant 0 : index
    %c0_14 = arith.constant 0 : index
    %36 = vector.load %arg3[%c0_12, %c0_13, %c0_14] : memref<2x32x128xbf16, #tpu.memory_space<vmem>>, vector<1x32x128xbf16>
    %37 = vector.shape_cast %36 : vector<1x32x128xbf16> to vector<32x128xbf16>
    %c0_15 = arith.constant 0 : index
    %c0_16 = arith.constant 0 : index
    %c0_17 = arith.constant 0 : index
    %38 = vector.load %arg4[%c0_15, %c0_16, %c0_17] : memref<2x1x96xf32, #tpu.memory_space<vmem>>, vector<1x1x96xf32>
    %39 = vector.shape_cast %38 : vector<1x1x96xf32> to vector<1x96xf32>
    %c0_18 = arith.constant 0 : index
    %c0_19 = arith.constant 0 : index
    %c0_20 = arith.constant 0 : index
    %40 = vector.load %arg8[%c0_18, %c0_19, %c0_20] : memref<2x1x64xf32, #tpu.memory_space<vmem>>, vector<1x1x64xf32>
    %41 = vector.shape_cast %40 : vector<1x1x64xf32> to vector<1x64xf32>
    %c0_21 = arith.constant 0 : index
    %c0_22 = arith.constant 0 : index
    %c0_23 = arith.constant 0 : index
    %42 = vector.load %arg5[%c0_21, %c0_22, %c0_23] : memref<2x32x64xbf16, #tpu.memory_space<vmem>>, vector<1x32x64xbf16>
    %43 = vector.shape_cast %42 : vector<1x32x64xbf16> to vector<32x64xbf16>
    %c0_24 = arith.constant 0 : index
    %c0_25 = arith.constant 0 : index
    %c0_26 = arith.constant 0 : index
    %44 = vector.load %arg6[%c0_24, %c0_25, %c0_26] : memref<2x64x32xbf16, #tpu.memory_space<vmem>>, vector<1x64x32xbf16>
    %45 = vector.shape_cast %44 : vector<1x64x32xbf16> to vector<64x32xbf16>
    %46 = arith.truncf %25 : vector<16x32xf32> to vector<16x32xbf16>
    %47 = vector.extract_strided_slice %37 {offsets = [0, 0], sizes = [32, 96], strides = [1, 1]} : vector<32x128xbf16> to vector<32x96xbf16>
    %cst_27 = arith.constant dense<0.000000e+00> : vector<16x96xf32>
    %48 = tpu.matmul %46, %47, %cst_27 {dimension_numbers = #tpu.dot_dimension_numbers<[1], [0], [0], [1], [0, 0, 1, 1], [], []>} : vector<16x32xbf16>, vector<32x96xbf16>, vector<16x96xf32> -> vector<16x96xf32>
    %49 = vector.broadcast %39 : vector<1x96xf32> to vector<16x96xf32>
    %50 = arith.addf %48, %49 : vector<16x96xf32>
    %51 = vector.extract_strided_slice %50 {offsets = [0, 0], sizes = [16, 32], strides = [1, 1]} : vector<16x96xf32> to vector<16x32xf32>
    %52 = vector.extract_strided_slice %50 {offsets = [0, 32], sizes = [16, 32], strides = [1, 1]} : vector<16x96xf32> to vector<16x32xf32>
    %53 = vector.extract_strided_slice %50 {offsets = [0, 64], sizes = [16, 32], strides = [1, 1]} : vector<16x96xf32> to vector<16x32xf32>
    %54 = vector.extract_strided_slice %51 {offsets = [0, 0], sizes = [16, 8], strides = [1, 1]} : vector<16x32xf32> to vector<16x8xf32>
    %55 = arith.truncf %54 : vector<16x8xf32> to vector<16x8xbf16>
    %56 = vector.extract_strided_slice %52 {offsets = [0, 0], sizes = [16, 8], strides = [1, 1]} : vector<16x32xf32> to vector<16x8xf32>
    %57 = arith.truncf %56 : vector<16x8xf32> to vector<16x8xbf16>
    %cst_28 = arith.constant dense<0.000000e+00> : vector<16x16xf32>
    %58 = tpu.matmul %55, %57, %cst_28 {dimension_numbers = #tpu.dot_dimension_numbers<[1], [1], [0], [0], [0, 0, 1, 0], [], []>} : vector<16x8xbf16>, vector<16x8xbf16>, vector<16x16xf32> -> vector<16x16xf32>
    %59 = vector.extract_strided_slice %51 {offsets = [0, 8], sizes = [16, 8], strides = [1, 1]} : vector<16x32xf32> to vector<16x8xf32>
    %60 = arith.truncf %59 : vector<16x8xf32> to vector<16x8xbf16>
    %61 = vector.extract_strided_slice %52 {offsets = [0, 8], sizes = [16, 8], strides = [1, 1]} : vector<16x32xf32> to vector<16x8xf32>
    %62 = arith.truncf %61 : vector<16x8xf32> to vector<16x8xbf16>
    %cst_29 = arith.constant dense<0.000000e+00> : vector<16x16xf32>
    %63 = tpu.matmul %60, %62, %cst_29 {dimension_numbers = #tpu.dot_dimension_numbers<[1], [1], [0], [0], [0, 0, 1, 0], [], []>} : vector<16x8xbf16>, vector<16x8xbf16>, vector<16x16xf32> -> vector<16x16xf32>
    %64 = vector.extract_strided_slice %51 {offsets = [0, 16], sizes = [16, 8], strides = [1, 1]} : vector<16x32xf32> to vector<16x8xf32>
    %65 = arith.truncf %64 : vector<16x8xf32> to vector<16x8xbf16>
    %66 = vector.extract_strided_slice %52 {offsets = [0, 16], sizes = [16, 8], strides = [1, 1]} : vector<16x32xf32> to vector<16x8xf32>
    %67 = arith.truncf %66 : vector<16x8xf32> to vector<16x8xbf16>
    %cst_30 = arith.constant dense<0.000000e+00> : vector<16x16xf32>
    %68 = tpu.matmul %65, %67, %cst_30 {dimension_numbers = #tpu.dot_dimension_numbers<[1], [1], [0], [0], [0, 0, 1, 0], [], []>} : vector<16x8xbf16>, vector<16x8xbf16>, vector<16x16xf32> -> vector<16x16xf32>
    %69 = vector.extract_strided_slice %51 {offsets = [0, 24], sizes = [16, 8], strides = [1, 1]} : vector<16x32xf32> to vector<16x8xf32>
    %70 = arith.truncf %69 : vector<16x8xf32> to vector<16x8xbf16>
    %71 = vector.extract_strided_slice %52 {offsets = [0, 24], sizes = [16, 8], strides = [1, 1]} : vector<16x32xf32> to vector<16x8xf32>
    %72 = arith.truncf %71 : vector<16x8xf32> to vector<16x8xbf16>
    %cst_31 = arith.constant dense<0.000000e+00> : vector<16x16xf32>
    %73 = tpu.matmul %70, %72, %cst_31 {dimension_numbers = #tpu.dot_dimension_numbers<[1], [1], [0], [0], [0, 0, 1, 0], [], []>} : vector<16x8xbf16>, vector<16x8xbf16>, vector<16x16xf32> -> vector<16x16xf32>
    %74 = tpu.concatenate %58, %63, %68, %73 in 0 : vector<16x16xf32>, vector<16x16xf32>, vector<16x16xf32>, vector<16x16xf32> -> vector<64x16xf32>
    %75 = arith.addf %74, %27 : vector<64x16xf32>
    %cst_32 = arith.constant dense<0xFF800000> : vector<64xf32>
    %76 = vector.multi_reduction <maximumf>, %75, %cst_32 [1] : vector<64x16xf32> to vector<64xf32>
    %77 = vector.shape_cast %76 : vector<64xf32> to vector<64x1xf32>
    %78 = vector.broadcast %77 : vector<64x1xf32> to vector<64x16xf32>
    %79 = arith.subf %75, %78 : vector<64x16xf32>
    %80 = math.exp %79 : vector<64x16xf32>
    %cst_33 = arith.constant dense<0.000000e+00> : vector<64xf32>
    %81 = vector.multi_reduction <add>, %80, %cst_33 [1] : vector<64x16xf32> to vector<64xf32>
    %82 = vector.shape_cast %81 : vector<64xf32> to vector<64x1xf32>
    %83 = tpu.reciprocal %82 {approx = true} : vector<64x1xf32> -> vector<64x1xf32>
    %84 = vector.broadcast %83 : vector<64x1xf32> to vector<64x16xf32>
    %85 = arith.mulf %80, %84 : vector<64x16xf32>
    %86 = vector.extract_strided_slice %85 {offsets = [0, 0], sizes = [16, 16], strides = [1, 1]} : vector<64x16xf32> to vector<16x16xf32>
    %87 = arith.truncf %86 : vector<16x16xf32> to vector<16x16xbf16>
    %88 = vector.extract_strided_slice %53 {offsets = [0, 0], sizes = [16, 8], strides = [1, 1]} : vector<16x32xf32> to vector<16x8xf32>
    %89 = arith.truncf %88 : vector<16x8xf32> to vector<16x8xbf16>
    %cst_34 = arith.constant dense<0.000000e+00> : vector<16x8xf32>
    %90 = tpu.matmul %87, %89, %cst_34 {dimension_numbers = #tpu.dot_dimension_numbers<[1], [0], [0], [1], [0, 0, 1, 1], [], []>} : vector<16x16xbf16>, vector<16x8xbf16>, vector<16x8xf32> -> vector<16x8xf32>
    %91 = vector.extract_strided_slice %85 {offsets = [16, 0], sizes = [16, 16], strides = [1, 1]} : vector<64x16xf32> to vector<16x16xf32>
    %92 = arith.truncf %91 : vector<16x16xf32> to vector<16x16xbf16>
    %93 = vector.extract_strided_slice %53 {offsets = [0, 8], sizes = [16, 8], strides = [1, 1]} : vector<16x32xf32> to vector<16x8xf32>
    %94 = arith.truncf %93 : vector<16x8xf32> to vector<16x8xbf16>
    %cst_35 = arith.constant dense<0.000000e+00> : vector<16x8xf32>
    %95 = tpu.matmul %92, %94, %cst_35 {dimension_numbers = #tpu.dot_dimension_numbers<[1], [0], [0], [1], [0, 0, 1, 1], [], []>} : vector<16x16xbf16>, vector<16x8xbf16>, vector<16x8xf32> -> vector<16x8xf32>
    %96 = vector.extract_strided_slice %85 {offsets = [32, 0], sizes = [16, 16], strides = [1, 1]} : vector<64x16xf32> to vector<16x16xf32>
    %97 = arith.truncf %96 : vector<16x16xf32> to vector<16x16xbf16>
    %98 = vector.extract_strided_slice %53 {offsets = [0, 16], sizes = [16, 8], strides = [1, 1]} : vector<16x32xf32> to vector<16x8xf32>
    %99 = arith.truncf %98 : vector<16x8xf32> to vector<16x8xbf16>
    %cst_36 = arith.constant dense<0.000000e+00> : vector<16x8xf32>
    %100 = tpu.matmul %97, %99, %cst_36 {dimension_numbers = #tpu.dot_dimension_numbers<[1], [0], [0], [1], [0, 0, 1, 1], [], []>} : vector<16x16xbf16>, vector<16x8xbf16>, vector<16x8xf32> -> vector<16x8xf32>
    %101 = vector.extract_strided_slice %85 {offsets = [48, 0], sizes = [16, 16], strides = [1, 1]} : vector<64x16xf32> to vector<16x16xf32>
    %102 = arith.truncf %101 : vector<16x16xf32> to vector<16x16xbf16>
    %103 = vector.extract_strided_slice %53 {offsets = [0, 24], sizes = [16, 8], strides = [1, 1]} : vector<16x32xf32> to vector<16x8xf32>
    %104 = arith.truncf %103 : vector<16x8xf32> to vector<16x8xbf16>
    %cst_37 = arith.constant dense<0.000000e+00> : vector<16x8xf32>
    %105 = tpu.matmul %102, %104, %cst_37 {dimension_numbers = #tpu.dot_dimension_numbers<[1], [0], [0], [1], [0, 0, 1, 1], [], []>} : vector<16x16xbf16>, vector<16x8xbf16>, vector<16x8xf32> -> vector<16x8xf32>
    %106 = tpu.concatenate %90, %95, %100, %105 in 1 : vector<16x8xf32>, vector<16x8xf32>, vector<16x8xf32>, vector<16x8xf32> -> vector<16x32xf32>
    %107 = arith.truncf %106 : vector<16x32xf32> to vector<16x32xbf16>
    %108 = vector.extract_strided_slice %37 {offsets = [0, 96], sizes = [32, 32], strides = [1, 1]} : vector<32x128xbf16> to vector<32x32xbf16>
    %cst_38 = arith.constant dense<0.000000e+00> : vector<16x32xf32>
    %109 = tpu.matmul %107, %108, %cst_38 {dimension_numbers = #tpu.dot_dimension_numbers<[1], [0], [0], [1], [0, 0, 1, 1], [], []>} : vector<16x32xbf16>, vector<32x32xbf16>, vector<16x32xf32> -> vector<16x32xf32>
    %110 = vector.broadcast %30 : vector<1x32xf32> to vector<16x32xf32>
    %111 = arith.addf %109, %110 : vector<16x32xf32>
    %112 = arith.addf %25, %111 : vector<16x32xf32>
    %cst_39 = arith.constant dense<0.000000e+00> : vector<16xf32>
    %113 = vector.multi_reduction <add>, %112, %cst_39 [1] : vector<16x32xf32> to vector<16xf32>
    %114 = vector.shape_cast %113 : vector<16xf32> to vector<16x1xf32>
    %cst_40 = arith.constant 3.200000e+01 : f32
    %115 = vector.broadcast %cst_40 : f32 to vector<16x1xf32>
    %116 = arith.divf %114, %115 : vector<16x1xf32>
    %117 = vector.broadcast %116 : vector<16x1xf32> to vector<16x32xf32>
    %118 = arith.subf %112, %117 : vector<16x32xf32>
    %119 = arith.mulf %118, %118 : vector<16x32xf32>
    %cst_41 = arith.constant dense<0.000000e+00> : vector<16xf32>
    %120 = vector.multi_reduction <add>, %119, %cst_41 [1] : vector<16x32xf32> to vector<16xf32>
    %121 = vector.shape_cast %120 : vector<16xf32> to vector<16x1xf32>
    %cst_42 = arith.constant 3.200000e+01 : f32
    %122 = vector.broadcast %cst_42 : f32 to vector<16x1xf32>
    %123 = arith.divf %121, %122 : vector<16x1xf32>
    %124 = vector.broadcast %116 : vector<16x1xf32> to vector<16x32xf32>
    %125 = arith.subf %112, %124 : vector<16x32xf32>
    %cst_43 = arith.constant 9.99999996E-13 : f32
    %126 = vector.broadcast %cst_43 : f32 to vector<16x1xf32>
    %127 = arith.addf %123, %126 : vector<16x1xf32>
    %128 = math.rsqrt %127 : vector<16x1xf32>
    %129 = vector.broadcast %128 : vector<16x1xf32> to vector<16x32xf32>
    %130 = arith.mulf %125, %129 : vector<16x32xf32>
    %131 = vector.broadcast %31 : vector<1x32xf32> to vector<16x32xf32>
    %132 = arith.mulf %130, %131 : vector<16x32xf32>
    %133 = vector.broadcast %32 : vector<1x32xf32> to vector<16x32xf32>
    %134 = arith.addf %132, %133 : vector<16x32xf32>
    %135 = arith.truncf %134 : vector<16x32xf32> to vector<16x32xbf16>
    %cst_44 = arith.constant dense<0.000000e+00> : vector<16x64xf32>
    %136 = tpu.matmul %135, %43, %cst_44 {dimension_numbers = #tpu.dot_dimension_numbers<[1], [0], [0], [1], [0, 0, 1, 1], [], []>} : vector<16x32xbf16>, vector<32x64xbf16>, vector<16x64xf32> -> vector<16x64xf32>
    %137 = vector.broadcast %41 : vector<1x64xf32> to vector<16x64xf32>
    %138 = arith.addf %136, %137 : vector<16x64xf32>
    %cst_45 = arith.constant 5.000000e-01 : f32
    %139 = vector.broadcast %cst_45 : f32 to vector<16x64xf32>
    %140 = arith.mulf %139, %138 : vector<16x64xf32>
    %cst_46 = arith.constant 4.471500e-02 : f32
    %141 = vector.broadcast %cst_46 : f32 to vector<16x64xf32>
    %142 = arith.mulf %141, %138 : vector<16x64xf32>
    %143 = arith.mulf %142, %138 : vector<16x64xf32>
    %144 = arith.mulf %143, %138 : vector<16x64xf32>
    %145 = arith.addf %138, %144 : vector<16x64xf32>
    %cst_47 = arith.constant 0.797884583 : f32
    %146 = vector.broadcast %cst_47 : f32 to vector<16x64xf32>
    %147 = arith.mulf %146, %145 : vector<16x64xf32>
    %148 = math.tanh %147 : vector<16x64xf32>
    %cst_48 = arith.constant 1.000000e+00 : f32
    %149 = vector.broadcast %cst_48 : f32 to vector<16x64xf32>
    %150 = arith.addf %149, %148 : vector<16x64xf32>
    %151 = arith.mulf %140, %150 : vector<16x64xf32>
    %152 = arith.truncf %151 : vector<16x64xf32> to vector<16x64xbf16>
    %cst_49 = arith.constant dense<0.000000e+00> : vector<16x32xf32>
    %153 = tpu.matmul %152, %45, %cst_49 {dimension_numbers = #tpu.dot_dimension_numbers<[1], [0], [0], [1], [0, 0, 1, 1], [], []>} : vector<16x64xbf16>, vector<64x32xbf16>, vector<16x32xf32> -> vector<16x32xf32>
    %154 = vector.broadcast %33 : vector<1x32xf32> to vector<16x32xf32>
    %155 = arith.addf %153, %154 : vector<16x32xf32>
    %156 = arith.addf %134, %155 : vector<16x32xf32>
    %cst_50 = arith.constant dense<0.000000e+00> : vector<16xf32>
    %157 = vector.multi_reduction <add>, %156, %cst_50 [1] : vector<16x32xf32> to vector<16xf32>
    %158 = vector.shape_cast %157 : vector<16xf32> to vector<16x1xf32>
    %cst_51 = arith.constant 3.200000e+01 : f32
    %159 = vector.broadcast %cst_51 : f32 to vector<16x1xf32>
    %160 = arith.divf %158, %159 : vector<16x1xf32>
    %161 = vector.broadcast %160 : vector<16x1xf32> to vector<16x32xf32>
    %162 = arith.subf %156, %161 : vector<16x32xf32>
    %163 = arith.mulf %162, %162 : vector<16x32xf32>
    %cst_52 = arith.constant dense<0.000000e+00> : vector<16xf32>
    %164 = vector.multi_reduction <add>, %163, %cst_52 [1] : vector<16x32xf32> to vector<16xf32>
    %165 = vector.shape_cast %164 : vector<16xf32> to vector<16x1xf32>
    %cst_53 = arith.constant 3.200000e+01 : f32
    %166 = vector.broadcast %cst_53 : f32 to vector<16x1xf32>
    %167 = arith.divf %165, %166 : vector<16x1xf32>
    %168 = vector.broadcast %160 : vector<16x1xf32> to vector<16x32xf32>
    %169 = arith.subf %156, %168 : vector<16x32xf32>
    %cst_54 = arith.constant 9.99999996E-13 : f32
    %170 = vector.broadcast %cst_54 : f32 to vector<16x1xf32>
    %171 = arith.addf %167, %170 : vector<16x1xf32>
    %172 = math.rsqrt %171 : vector<16x1xf32>
    %173 = vector.broadcast %172 : vector<16x1xf32> to vector<16x32xf32>
    %174 = arith.mulf %169, %173 : vector<16x32xf32>
    %175 = vector.broadcast %34 : vector<1x32xf32> to vector<16x32xf32>
    %176 = arith.mulf %174, %175 : vector<16x32xf32>
    %177 = vector.broadcast %35 : vector<1x32xf32> to vector<16x32xf32>
    %178 = arith.addf %176, %177 : vector<16x32xf32>
    %c1 = arith.constant 1 : index
    %c0_55 = arith.constant 0 : index
    %c0_56 = arith.constant 0 : index
    %179 = vector.load %arg7[%c1, %c0_55, %c0_56] : memref<2x6x32xf32, #tpu.memory_space<vmem>>, vector<1x6x32xf32>
    %180 = vector.shape_cast %179 : vector<1x6x32xf32> to vector<6x32xf32>
    %181 = vector.extract_strided_slice %180 {offsets = [0, 0], sizes = [1, 32], strides = [1, 1]} : vector<6x32xf32> to vector<1x32xf32>
    %182 = vector.extract_strided_slice %180 {offsets = [1, 0], sizes = [1, 32], strides = [1, 1]} : vector<6x32xf32> to vector<1x32xf32>
    %183 = vector.extract_strided_slice %180 {offsets = [2, 0], sizes = [1, 32], strides = [1, 1]} : vector<6x32xf32> to vector<1x32xf32>
    %184 = vector.extract_strided_slice %180 {offsets = [3, 0], sizes = [1, 32], strides = [1, 1]} : vector<6x32xf32> to vector<1x32xf32>
    %185 = vector.extract_strided_slice %180 {offsets = [4, 0], sizes = [1, 32], strides = [1, 1]} : vector<6x32xf32> to vector<1x32xf32>
    %186 = vector.extract_strided_slice %180 {offsets = [5, 0], sizes = [1, 32], strides = [1, 1]} : vector<6x32xf32> to vector<1x32xf32>
    %c1_57 = arith.constant 1 : index
    %c0_58 = arith.constant 0 : index
    %c0_59 = arith.constant 0 : index
    %187 = vector.load %arg3[%c1_57, %c0_58, %c0_59] : memref<2x32x128xbf16, #tpu.memory_space<vmem>>, vector<1x32x128xbf16>
    %188 = vector.shape_cast %187 : vector<1x32x128xbf16> to vector<32x128xbf16>
    %c1_60 = arith.constant 1 : index
    %c0_61 = arith.constant 0 : index
    %c0_62 = arith.constant 0 : index
    %189 = vector.load %arg4[%c1_60, %c0_61, %c0_62] : memref<2x1x96xf32, #tpu.memory_space<vmem>>, vector<1x1x96xf32>
    %190 = vector.shape_cast %189 : vector<1x1x96xf32> to vector<1x96xf32>
    %c1_63 = arith.constant 1 : index
    %c0_64 = arith.constant 0 : index
    %c0_65 = arith.constant 0 : index
    %191 = vector.load %arg8[%c1_63, %c0_64, %c0_65] : memref<2x1x64xf32, #tpu.memory_space<vmem>>, vector<1x1x64xf32>
    %192 = vector.shape_cast %191 : vector<1x1x64xf32> to vector<1x64xf32>
    %c1_66 = arith.constant 1 : index
    %c0_67 = arith.constant 0 : index
    %c0_68 = arith.constant 0 : index
    %193 = vector.load %arg5[%c1_66, %c0_67, %c0_68] : memref<2x32x64xbf16, #tpu.memory_space<vmem>>, vector<1x32x64xbf16>
    %194 = vector.shape_cast %193 : vector<1x32x64xbf16> to vector<32x64xbf16>
    %c1_69 = arith.constant 1 : index
    %c0_70 = arith.constant 0 : index
    %c0_71 = arith.constant 0 : index
    %195 = vector.load %arg6[%c1_69, %c0_70, %c0_71] : memref<2x64x32xbf16, #tpu.memory_space<vmem>>, vector<1x64x32xbf16>
    %196 = vector.shape_cast %195 : vector<1x64x32xbf16> to vector<64x32xbf16>
    %197 = arith.truncf %178 : vector<16x32xf32> to vector<16x32xbf16>
    %198 = vector.extract_strided_slice %188 {offsets = [0, 0], sizes = [32, 96], strides = [1, 1]} : vector<32x128xbf16> to vector<32x96xbf16>
    %cst_72 = arith.constant dense<0.000000e+00> : vector<16x96xf32>
    %199 = tpu.matmul %197, %198, %cst_72 {dimension_numbers = #tpu.dot_dimension_numbers<[1], [0], [0], [1], [0, 0, 1, 1], [], []>} : vector<16x32xbf16>, vector<32x96xbf16>, vector<16x96xf32> -> vector<16x96xf32>
    %200 = vector.broadcast %190 : vector<1x96xf32> to vector<16x96xf32>
    %201 = arith.addf %199, %200 : vector<16x96xf32>
    %202 = vector.extract_strided_slice %201 {offsets = [0, 0], sizes = [16, 32], strides = [1, 1]} : vector<16x96xf32> to vector<16x32xf32>
    %203 = vector.extract_strided_slice %201 {offsets = [0, 32], sizes = [16, 32], strides = [1, 1]} : vector<16x96xf32> to vector<16x32xf32>
    %204 = vector.extract_strided_slice %201 {offsets = [0, 64], sizes = [16, 32], strides = [1, 1]} : vector<16x96xf32> to vector<16x32xf32>
    %205 = vector.extract_strided_slice %202 {offsets = [0, 0], sizes = [16, 8], strides = [1, 1]} : vector<16x32xf32> to vector<16x8xf32>
    %206 = arith.truncf %205 : vector<16x8xf32> to vector<16x8xbf16>
    %207 = vector.extract_strided_slice %203 {offsets = [0, 0], sizes = [16, 8], strides = [1, 1]} : vector<16x32xf32> to vector<16x8xf32>
    %208 = arith.truncf %207 : vector<16x8xf32> to vector<16x8xbf16>
    %cst_73 = arith.constant dense<0.000000e+00> : vector<16x16xf32>
    %209 = tpu.matmul %206, %208, %cst_73 {dimension_numbers = #tpu.dot_dimension_numbers<[1], [1], [0], [0], [0, 0, 1, 0], [], []>} : vector<16x8xbf16>, vector<16x8xbf16>, vector<16x16xf32> -> vector<16x16xf32>
    %210 = vector.extract_strided_slice %202 {offsets = [0, 8], sizes = [16, 8], strides = [1, 1]} : vector<16x32xf32> to vector<16x8xf32>
    %211 = arith.truncf %210 : vector<16x8xf32> to vector<16x8xbf16>
    %212 = vector.extract_strided_slice %203 {offsets = [0, 8], sizes = [16, 8], strides = [1, 1]} : vector<16x32xf32> to vector<16x8xf32>
    %213 = arith.truncf %212 : vector<16x8xf32> to vector<16x8xbf16>
    %cst_74 = arith.constant dense<0.000000e+00> : vector<16x16xf32>
    %214 = tpu.matmul %211, %213, %cst_74 {dimension_numbers = #tpu.dot_dimension_numbers<[1], [1], [0], [0], [0, 0, 1, 0], [], []>} : vector<16x8xbf16>, vector<16x8xbf16>, vector<16x16xf32> -> vector<16x16xf32>
    %215 = vector.extract_strided_slice %202 {offsets = [0, 16], sizes = [16, 8], strides = [1, 1]} : vector<16x32xf32> to vector<16x8xf32>
    %216 = arith.truncf %215 : vector<16x8xf32> to vector<16x8xbf16>
    %217 = vector.extract_strided_slice %203 {offsets = [0, 16], sizes = [16, 8], strides = [1, 1]} : vector<16x32xf32> to vector<16x8xf32>
    %218 = arith.truncf %217 : vector<16x8xf32> to vector<16x8xbf16>
    %cst_75 = arith.constant dense<0.000000e+00> : vector<16x16xf32>
    %219 = tpu.matmul %216, %218, %cst_75 {dimension_numbers = #tpu.dot_dimension_numbers<[1], [1], [0], [0], [0, 0, 1, 0], [], []>} : vector<16x8xbf16>, vector<16x8xbf16>, vector<16x16xf32> -> vector<16x16xf32>
    %220 = vector.extract_strided_slice %202 {offsets = [0, 24], sizes = [16, 8], strides = [1, 1]} : vector<16x32xf32> to vector<16x8xf32>
    %221 = arith.truncf %220 : vector<16x8xf32> to vector<16x8xbf16>
    %222 = vector.extract_strided_slice %203 {offsets = [0, 24], sizes = [16, 8], strides = [1, 1]} : vector<16x32xf32> to vector<16x8xf32>
    %223 = arith.truncf %222 : vector<16x8xf32> to vector<16x8xbf16>
    %cst_76 = arith.constant dense<0.000000e+00> : vector<16x16xf32>
    %224 = tpu.matmul %221, %223, %cst_76 {dimension_numbers = #tpu.dot_dimension_numbers<[1], [1], [0], [0], [0, 0, 1, 0], [], []>} : vector<16x8xbf16>, vector<16x8xbf16>, vector<16x16xf32> -> vector<16x16xf32>
    %225 = tpu.concatenate %209, %214, %219, %224 in 0 : vector<16x16xf32>, vector<16x16xf32>, vector<16x16xf32>, vector<16x16xf32> -> vector<64x16xf32>
    %226 = arith.addf %225, %27 : vector<64x16xf32>
    %cst_77 = arith.constant dense<0xFF800000> : vector<64xf32>
    %227 = vector.multi_reduction <maximumf>, %226, %cst_77 [1] : vector<64x16xf32> to vector<64xf32>
    %228 = vector.shape_cast %227 : vector<64xf32> to vector<64x1xf32>
    %229 = vector.broadcast %228 : vector<64x1xf32> to vector<64x16xf32>
    %230 = arith.subf %226, %229 : vector<64x16xf32>
    %231 = math.exp %230 : vector<64x16xf32>
    %cst_78 = arith.constant dense<0.000000e+00> : vector<64xf32>
    %232 = vector.multi_reduction <add>, %231, %cst_78 [1] : vector<64x16xf32> to vector<64xf32>
    %233 = vector.shape_cast %232 : vector<64xf32> to vector<64x1xf32>
    %234 = tpu.reciprocal %233 {approx = true} : vector<64x1xf32> -> vector<64x1xf32>
    %235 = vector.broadcast %234 : vector<64x1xf32> to vector<64x16xf32>
    %236 = arith.mulf %231, %235 : vector<64x16xf32>
    %237 = vector.extract_strided_slice %236 {offsets = [0, 0], sizes = [16, 16], strides = [1, 1]} : vector<64x16xf32> to vector<16x16xf32>
    %238 = arith.truncf %237 : vector<16x16xf32> to vector<16x16xbf16>
    %239 = vector.extract_strided_slice %204 {offsets = [0, 0], sizes = [16, 8], strides = [1, 1]} : vector<16x32xf32> to vector<16x8xf32>
    %240 = arith.truncf %239 : vector<16x8xf32> to vector<16x8xbf16>
    %cst_79 = arith.constant dense<0.000000e+00> : vector<16x8xf32>
    %241 = tpu.matmul %238, %240, %cst_79 {dimension_numbers = #tpu.dot_dimension_numbers<[1], [0], [0], [1], [0, 0, 1, 1], [], []>} : vector<16x16xbf16>, vector<16x8xbf16>, vector<16x8xf32> -> vector<16x8xf32>
    %242 = vector.extract_strided_slice %236 {offsets = [16, 0], sizes = [16, 16], strides = [1, 1]} : vector<64x16xf32> to vector<16x16xf32>
    %243 = arith.truncf %242 : vector<16x16xf32> to vector<16x16xbf16>
    %244 = vector.extract_strided_slice %204 {offsets = [0, 8], sizes = [16, 8], strides = [1, 1]} : vector<16x32xf32> to vector<16x8xf32>
    %245 = arith.truncf %244 : vector<16x8xf32> to vector<16x8xbf16>
    %cst_80 = arith.constant dense<0.000000e+00> : vector<16x8xf32>
    %246 = tpu.matmul %243, %245, %cst_80 {dimension_numbers = #tpu.dot_dimension_numbers<[1], [0], [0], [1], [0, 0, 1, 1], [], []>} : vector<16x16xbf16>, vector<16x8xbf16>, vector<16x8xf32> -> vector<16x8xf32>
    %247 = vector.extract_strided_slice %236 {offsets = [32, 0], sizes = [16, 16], strides = [1, 1]} : vector<64x16xf32> to vector<16x16xf32>
    %248 = arith.truncf %247 : vector<16x16xf32> to vector<16x16xbf16>
    %249 = vector.extract_strided_slice %204 {offsets = [0, 16], sizes = [16, 8], strides = [1, 1]} : vector<16x32xf32> to vector<16x8xf32>
    %250 = arith.truncf %249 : vector<16x8xf32> to vector<16x8xbf16>
    %cst_81 = arith.constant dense<0.000000e+00> : vector<16x8xf32>
    %251 = tpu.matmul %248, %250, %cst_81 {dimension_numbers = #tpu.dot_dimension_numbers<[1], [0], [0], [1], [0, 0, 1, 1], [], []>} : vector<16x16xbf16>, vector<16x8xbf16>, vector<16x8xf32> -> vector<16x8xf32>
    %252 = vector.extract_strided_slice %236 {offsets = [48, 0], sizes = [16, 16], strides = [1, 1]} : vector<64x16xf32> to vector<16x16xf32>
    %253 = arith.truncf %252 : vector<16x16xf32> to vector<16x16xbf16>
    %254 = vector.extract_strided_slice %204 {offsets = [0, 24], sizes = [16, 8], strides = [1, 1]} : vector<16x32xf32> to vector<16x8xf32>
    %255 = arith.truncf %254 : vector<16x8xf32> to vector<16x8xbf16>
    %cst_82 = arith.constant dense<0.000000e+00> : vector<16x8xf32>
    %256 = tpu.matmul %253, %255, %cst_82 {dimension_numbers = #tpu.dot_dimension_numbers<[1], [0], [0], [1], [0, 0, 1, 1], [], []>} : vector<16x16xbf16>, vector<16x8xbf16>, vector<16x8xf32> -> vector<16x8xf32>
    %257 = tpu.concatenate %241, %246, %251, %256 in 1 : vector<16x8xf32>, vector<16x8xf32>, vector<16x8xf32>, vector<16x8xf32> -> vector<16x32xf32>
    %258 = arith.truncf %257 : vector<16x32xf32> to vector<16x32xbf16>
    %259 = vector.extract_strided_slice %188 {offsets = [0, 96], sizes = [32, 32], strides = [1, 1]} : vector<32x128xbf16> to vector<32x32xbf16>
    %cst_83 = arith.constant dense<0.000000e+00> : vector<16x32xf32>
    %260 = tpu.matmul %258, %259, %cst_83 {dimension_numbers = #tpu.dot_dimension_numbers<[1], [0], [0], [1], [0, 0, 1, 1], [], []>} : vector<16x32xbf16>, vector<32x32xbf16>, vector<16x32xf32> -> vector<16x32xf32>
    %261 = vector.broadcast %181 : vector<1x32xf32> to vector<16x32xf32>
    %262 = arith.addf %260, %261 : vector<16x32xf32>
    %263 = arith.addf %178, %262 : vector<16x32xf32>
    %cst_84 = arith.constant dense<0.000000e+00> : vector<16xf32>
    %264 = vector.multi_reduction <add>, %263, %cst_84 [1] : vector<16x32xf32> to vector<16xf32>
    %265 = vector.shape_cast %264 : vector<16xf32> to vector<16x1xf32>
    %cst_85 = arith.constant 3.200000e+01 : f32
    %266 = vector.broadcast %cst_85 : f32 to vector<16x1xf32>
    %267 = arith.divf %265, %266 : vector<16x1xf32>
    %268 = vector.broadcast %267 : vector<16x1xf32> to vector<16x32xf32>
    %269 = arith.subf %263, %268 : vector<16x32xf32>
    %270 = arith.mulf %269, %269 : vector<16x32xf32>
    %cst_86 = arith.constant dense<0.000000e+00> : vector<16xf32>
    %271 = vector.multi_reduction <add>, %270, %cst_86 [1] : vector<16x32xf32> to vector<16xf32>
    %272 = vector.shape_cast %271 : vector<16xf32> to vector<16x1xf32>
    %cst_87 = arith.constant 3.200000e+01 : f32
    %273 = vector.broadcast %cst_87 : f32 to vector<16x1xf32>
    %274 = arith.divf %272, %273 : vector<16x1xf32>
    %275 = vector.broadcast %267 : vector<16x1xf32> to vector<16x32xf32>
    %276 = arith.subf %263, %275 : vector<16x32xf32>
    %cst_88 = arith.constant 9.99999996E-13 : f32
    %277 = vector.broadcast %cst_88 : f32 to vector<16x1xf32>
    %278 = arith.addf %274, %277 : vector<16x1xf32>
    %279 = math.rsqrt %278 : vector<16x1xf32>
    %280 = vector.broadcast %279 : vector<16x1xf32> to vector<16x32xf32>
    %281 = arith.mulf %276, %280 : vector<16x32xf32>
    %282 = vector.broadcast %182 : vector<1x32xf32> to vector<16x32xf32>
    %283 = arith.mulf %281, %282 : vector<16x32xf32>
    %284 = vector.broadcast %183 : vector<1x32xf32> to vector<16x32xf32>
    %285 = arith.addf %283, %284 : vector<16x32xf32>
    %286 = arith.truncf %285 : vector<16x32xf32> to vector<16x32xbf16>
    %cst_89 = arith.constant dense<0.000000e+00> : vector<16x64xf32>
    %287 = tpu.matmul %286, %194, %cst_89 {dimension_numbers = #tpu.dot_dimension_numbers<[1], [0], [0], [1], [0, 0, 1, 1], [], []>} : vector<16x32xbf16>, vector<32x64xbf16>, vector<16x64xf32> -> vector<16x64xf32>
    %288 = vector.broadcast %192 : vector<1x64xf32> to vector<16x64xf32>
    %289 = arith.addf %287, %288 : vector<16x64xf32>
    %cst_90 = arith.constant 5.000000e-01 : f32
    %290 = vector.broadcast %cst_90 : f32 to vector<16x64xf32>
    %291 = arith.mulf %290, %289 : vector<16x64xf32>
    %cst_91 = arith.constant 4.471500e-02 : f32
    %292 = vector.broadcast %cst_91 : f32 to vector<16x64xf32>
    %293 = arith.mulf %292, %289 : vector<16x64xf32>
    %294 = arith.mulf %293, %289 : vector<16x64xf32>
    %295 = arith.mulf %294, %289 : vector<16x64xf32>
    %296 = arith.addf %289, %295 : vector<16x64xf32>
    %cst_92 = arith.constant 0.797884583 : f32
    %297 = vector.broadcast %cst_92 : f32 to vector<16x64xf32>
    %298 = arith.mulf %297, %296 : vector<16x64xf32>
    %299 = math.tanh %298 : vector<16x64xf32>
    %cst_93 = arith.constant 1.000000e+00 : f32
    %300 = vector.broadcast %cst_93 : f32 to vector<16x64xf32>
    %301 = arith.addf %300, %299 : vector<16x64xf32>
    %302 = arith.mulf %291, %301 : vector<16x64xf32>
    %303 = arith.truncf %302 : vector<16x64xf32> to vector<16x64xbf16>
    %cst_94 = arith.constant dense<0.000000e+00> : vector<16x32xf32>
    %304 = tpu.matmul %303, %196, %cst_94 {dimension_numbers = #tpu.dot_dimension_numbers<[1], [0], [0], [1], [0, 0, 1, 1], [], []>} : vector<16x64xbf16>, vector<64x32xbf16>, vector<16x32xf32> -> vector<16x32xf32>
    %305 = vector.broadcast %184 : vector<1x32xf32> to vector<16x32xf32>
    %306 = arith.addf %304, %305 : vector<16x32xf32>
    %307 = arith.addf %285, %306 : vector<16x32xf32>
    %cst_95 = arith.constant dense<0.000000e+00> : vector<16xf32>
    %308 = vector.multi_reduction <add>, %307, %cst_95 [1] : vector<16x32xf32> to vector<16xf32>
    %309 = vector.shape_cast %308 : vector<16xf32> to vector<16x1xf32>
    %cst_96 = arith.constant 3.200000e+01 : f32
    %310 = vector.broadcast %cst_96 : f32 to vector<16x1xf32>
    %311 = arith.divf %309, %310 : vector<16x1xf32>
    %312 = vector.broadcast %311 : vector<16x1xf32> to vector<16x32xf32>
    %313 = arith.subf %307, %312 : vector<16x32xf32>
    %314 = arith.mulf %313, %313 : vector<16x32xf32>
    %cst_97 = arith.constant dense<0.000000e+00> : vector<16xf32>
    %315 = vector.multi_reduction <add>, %314, %cst_97 [1] : vector<16x32xf32> to vector<16xf32>
    %316 = vector.shape_cast %315 : vector<16xf32> to vector<16x1xf32>
    %cst_98 = arith.constant 3.200000e+01 : f32
    %317 = vector.broadcast %cst_98 : f32 to vector<16x1xf32>
    %318 = arith.divf %316, %317 : vector<16x1xf32>
    %319 = vector.broadcast %311 : vector<16x1xf32> to vector<16x32xf32>
    %320 = arith.subf %307, %319 : vector<16x32xf32>
    %cst_99 = arith.constant 9.99999996E-13 : f32
    %321 = vector.broadcast %cst_99 : f32 to vector<16x1xf32>
    %322 = arith.addf %318, %321 : vector<16x1xf32>
    %323 = math.rsqrt %322 : vector<16x1xf32>
    %324 = vector.broadcast %323 : vector<16x1xf32> to vector<16x32xf32>
    %325 = arith.mulf %320, %324 : vector<16x32xf32>
    %326 = vector.broadcast %185 : vector<1x32xf32> to vector<16x32xf32>
    %327 = arith.mulf %325, %326 : vector<16x32xf32>
    %328 = vector.broadcast %186 : vector<1x32xf32> to vector<16x32xf32>
    %329 = arith.addf %327, %328 : vector<16x32xf32>
    %c0_100 = arith.constant 0 : index
    %c0_101 = arith.constant 0 : index
    %330 = vector.load %arg9[%c0_100, %c0_101] : memref<1x32xf32, #tpu.memory_space<vmem>>, vector<1x32xf32>
    %c0_102 = arith.constant 0 : index
    %c0_103 = arith.constant 0 : index
    %331 = vector.load %arg10[%c0_102, %c0_103] : memref<1x1xf32, #tpu.memory_space<vmem>>, vector<1x1xf32>
    %332 = vector.extract_strided_slice %329 {offsets = [0, 0], sizes = [1, 32], strides = [1, 1]} : vector<16x32xf32> to vector<1x32xf32>
    %333 = vector.extract_strided_slice %329 {offsets = [8, 0], sizes = [1, 32], strides = [1, 1]} : vector<16x32xf32> to vector<1x32xf32>
    %334 = tpu.concatenate %332, %333 in 0 : vector<1x32xf32>, vector<1x32xf32> -> vector<2x32xf32>
    %335 = vector.broadcast %330 : vector<1x32xf32> to vector<2x32xf32>
    %336 = arith.mulf %334, %335 : vector<2x32xf32>
    %cst_104 = arith.constant dense<0.000000e+00> : vector<2xf32>
    %337 = vector.multi_reduction <add>, %336, %cst_104 [1] : vector<2x32xf32> to vector<2xf32>
    %338 = vector.shape_cast %337 : vector<2xf32> to vector<2x1xf32>
    %339 = vector.broadcast %331 : vector<1x1xf32> to vector<2x1xf32>
    %340 = arith.addf %338, %339 : vector<2x1xf32>
    %341 = vector.shape_cast %340 : vector<2x1xf32> to vector<2x1xf32>
    %342 = vector.broadcast %341 : vector<2x1xf32> to vector<2x128xf32>
    %c0_105 = arith.constant 0 : index
    %c0_106 = arith.constant 0 : index
    %343 = vector.load %arg11[%c0_105, %c0_106] : memref<2x128xf32, #tpu.memory_space<vmem>>, vector<2x128xf32>
    tpu.vector_store %arg11[%c0_105, %c0_106], %342 {strides = array<i32>} : memref<2x128xf32, #tpu.memory_space<vmem>>, vector<2x128xf32>,
    return
  }
}

</mosaic_0001>

<llo_original>
// kernel: model_forward.1
$region0: #{model_forward.1}
  #allocation0 [shape = 'u32[]', space=smem, size = 0x4, offset = 0x4, fixed_abs, tag = 'smem constant byte address 0x4 - core index']
  #allocation1 [shape = 'u32[144,128]{1,0:T(1,128)}', space=vmem, size = 0x12000, scoped, tag = 'internal scratch']
  #allocation2 [shape = 'f32[1,1]{1,0:T(1,128)S(1)}', space=vmem, size = 0x200, scoped, tag = 'scoped memory for model_forward.1']
  %s0 = inlined_call_operand.vmem [shape: f32[16,32], index: 0, kind: input, shape index: {}]
  %s1 = inlined_call_operand.vmem [shape: f32[16,16], index: 1, kind: input, shape index: {}]
  %s2 = inlined_call_operand.vmem [shape: f32[2,32], index: 2, kind: input, shape index: {}]
  %s3 = inlined_call_operand.vmem [shape: bf16[2,32,128], index: 3, kind: input, shape index: {}]
  %s4 = inlined_call_operand.vmem [shape: f32[2,1,96], index: 4, kind: input, shape index: {}]
  %s5 = inlined_call_operand.vmem [shape: bf16[2,32,64], index: 5, kind: input, shape index: {}]
  %s6 = inlined_call_operand.vmem [shape: bf16[2,64,32], index: 6, kind: input, shape index: {}]
  %s7 = inlined_call_operand.vmem [shape: f32[2,6,32], index: 7, kind: input, shape index: {}]
  %s8 = inlined_call_operand.vmem [shape: f32[2,1,64], index: 8, kind: input, shape index: {}]
  %s9 = inlined_call_operand.vmem [shape: f32[1,32], index: 9, kind: input, shape index: {}]
  %s10 = inlined_call_operand.<no memory space> [shape: f32[1,1], index: 10, kind: input, shape index: {}]
  %s11 = inlined_call_operand.vmem [shape: f32[2,128], index: 11, kind: output, shape index: {}]
  %s12 = sld [smem:[#allocation0]]
  $region54: #{model_forward.1} parent=0
    _
  %s14 = ssub.s32 1, %s12
  %s15 = scalar_select 0, %s14, %s12
  %v16 = vstv %s10
  %17 = vst [vmem:[#allocation2] sm:$0x1] %v16
  // Predicated region
  $region2: #{model_forward.1} parent=0 // pred_check
    _
  $region3: #{model_forward.1} parent=0 // pred_check_branch
    %19 = sbr.rel (0) target = $region5
  $region4: #{model_forward.1} parent=0 // pred_region
    _
  $region5: #{model_forward.1} parent=0 // pred_fallthru
    _
  // Predicated region
  $region6: #{model_forward.1} parent=0 // pred_check
    _
  $region7: #{model_forward.1} parent=0 // pred_check_branch
    %21 = sbr.rel (0) target = $region9
  $region8: #{model_forward.1} parent=0 // pred_region
    _
  $region9: #{model_forward.1} parent=0 // pred_fallthru
    _
  // Predicated region
  $region10: #{model_forward.1} parent=0 // pred_check
    _
  $region11: #{model_forward.1} parent=0 // pred_check_branch
    %23 = sbr.rel (0) target = $region13
  $region12: #{model_forward.1} parent=0 // pred_region
    _
  $region13: #{model_forward.1} parent=0 // pred_fallthru
    _
  // Predicated region
  $region14: #{model_forward.1} parent=0 // pred_check
    _
  $region15: #{model_forward.1} parent=0 // pred_check_branch
    %25 = sbr.rel (0) target = $region17
  $region16: #{model_forward.1} parent=0 // pred_region
    _
  $region17: #{model_forward.1} parent=0 // pred_fallthru
    _
  // Predicated region
  $region18: #{model_forward.1} parent=0 // pred_check
    _
  $region19: #{model_forward.1} parent=0 // pred_check_branch
    %27 = sbr.rel (0) target = $region21
  $region20: #{model_forward.1} parent=0 // pred_region
    _
  $region21: #{model_forward.1} parent=0 // pred_fallthru
    _
  // Predicated region
  $region22: #{model_forward.1} parent=0 // pred_check
    _
  $region23: #{model_forward.1} parent=0 // pred_check_branch
    %29 = sbr.rel (0) target = $region25
  $region24: #{model_forward.1} parent=0 // pred_region
    _
  $region25: #{model_forward.1} parent=0 // pred_fallthru
    _
  // Predicated region
  $region26: #{model_forward.1} parent=0 // pred_check
    _
  $region27: #{model_forward.1} parent=0 // pred_check_branch
    %31 = sbr.rel (0) target = $region29
  $region28: #{model_forward.1} parent=0 // pred_region
    _
  $region29: #{model_forward.1} parent=0 // pred_fallthru
    _
  // Predicated region
  $region30: #{model_forward.1} parent=0 // pred_check
    _
  $region31: #{model_forward.1} parent=0 // pred_check_branch
    %33 = sbr.rel (0) target = $region33
  $region32: #{model_forward.1} parent=0 // pred_region
    _
  $region33: #{model_forward.1} parent=0 // pred_fallthru
    _
  // Predicated region
  $region34: #{model_forward.1} parent=0 // pred_check
    _
  $region35: #{model_forward.1} parent=0 // pred_check_branch
    %35 = sbr.rel (0) target = $region37
  $region36: #{model_forward.1} parent=0 // pred_region
    _
  $region37: #{model_forward.1} parent=0 // pred_fallthru
    _
  // Predicated region
  $region38: #{model_forward.1} parent=0 // pred_check
    _
  $region39: #{model_forward.1} parent=0 // pred_check_branch
    %37 = sbr.rel (0) target = $region41
  $region40: #{model_forward.1} parent=0 // pred_region
    _
  $region41: #{model_forward.1} parent=0 // pred_fallthru
    _
  // Predicated region
  $region42: #{model_forward.1} parent=0 // pred_check
    _
  $region43: #{model_forward.1} parent=0 // pred_check_branch
    %39 = sbr.rel (0) target = $region45
  $region44: #{model_forward.1} parent=0 // pred_region
    _
  $region45: #{model_forward.1} parent=0 // pred_fallthru
    _
  %v41 = vld [vmem:[%s2] sm:$0x3]
  %v42 = vld [vmem:[%s0] sm:$0xff]
  %v43 = vld [vmem:[%s0 + $0x8] sm:$0xff]
  %vm44 = vcmask 261120
  %v45 = vsel %vm44, %v42, 0.0
  %46 = vadd.xlane.f32.xlu0 %v45
  %v47 = vpop.xlane.xlu0 %46
  %v48 = vsel %vm44, %v43, 0.0
  %49 = vadd.xlane.f32.xlu0 %v48
  %v50 = vpop.xlane.xlu0 %49
  %v51 = vrcp.pop 32.0
  %v52 = vmul.f32 %v47, %v51
  %v53 = vmul.f32 %v50, %v51
  %v54 = vsub.f32 %v42, %v52
  %v55 = vsub.f32 %v43, %v53
  %v56 = vmul.f32 %v54, %v54
  %v57 = vmul.f32 %v55, %v55
  %v58 = vsel %vm44, %v56, 0.0
  %59 = vadd.xlane.f32.xlu0 %v58
  %v60 = vpop.xlane.xlu0 %59
  %v61 = vsel %vm44, %v57, 0.0
  %62 = vadd.xlane.f32.xlu0 %v61
  %v63 = vpop.xlane.xlu0 %62
  %v64 = vmul.f32 %v60, %v51
  %v65 = vmul.f32 %v63, %v51
  %v66 = vadd.f32 %v64, 1e-12
  %v67 = vadd.f32 %v65, 1e-12
  %v68 = vrsqrt.pop %v66
  %v69 = vrsqrt.pop %v67
  %v70 = vmul.f32 %v54, %v68
  %v71 = vmul.f32 %v55, %v69
  %v72 = vlaneseq
  %v73 = vshrl.u32 %v72, 7
  %v74 = vsub.s32 0, %v73
  %v75 = vrot.slane %v41, %v74
  %v76 = vmul.f32 %v70, %v75
  %v77 = vmul.f32 %v71, %v75
  %v78 = vlaneseq
  %v79 = vshrl.u32 %v78, 7
  %v80 = vsub.s32 1, %v79
  %v81 = vrot.slane %v41, %v80
  %v82 = vadd.f32 %v76, %v81
  %v83 = vadd.f32 %v77, %v81
  %v84 = vld [vmem:[%s1] sm:$0xff]
  %v85 = vld [vmem:[%s1 + $0x8] sm:$0xff]
  %v86 = vld [vmem:[%s7] sm:$0x3f]
  %v87 = vld [vmem:[%s3] sm:$0xf]
  %v88 = vld [vmem:[%s3 + $0x4] sm:$0xf]
  %v89 = vld [vmem:[%s3 + $0x8] sm:$0xf]
  %v90 = vld [vmem:[%s3 + $0xc] sm:$0xf]
  %v91 = vld [vmem:[%s4] sm:$0x1]
  %v92 = vld [vmem:[%s8] sm:$0x1]
  %v93 = vld [vmem:[%s5] sm:$0xf]
  %v94 = vld [vmem:[%s5 + $0x4] sm:$0xf]
  %v95 = vld [vmem:[%s5 + $0x8] sm:$0xf]
  %v96 = vld [vmem:[%s5 + $0xc] sm:$0xf]
  %v97 = vld [vmem:[%s6] sm:$0xf]
  %v98 = vld [vmem:[%s6 + $0x4] sm:$0xf]
  %v99 = vld [vmem:[%s6 + $0x8] sm:$0xf]
  %v100 = vld [vmem:[%s6 + $0xc] sm:$0xf]
  %v101 = vld [vmem:[%s6 + $0x10] sm:$0xf]
  %v102 = vld [vmem:[%s6 + $0x14] sm:$0xf]
  %v103 = vld [vmem:[%s6 + $0x18] sm:$0xf]
  %v104 = vld [vmem:[%s6 + $0x1c] sm:$0xf]
  %v105 = vpack.c.bf16 %v83, %v82
  %v107 = vlaneseq
  %v108 = vshrl.u32 %v107, 7
  %v109 = vsub.s32 0, %v108
  %v110 = vrot.slane %v91, %v109
  %v116 = vunpack.c.l.b16 %v87
  %v117 = vunpack.c.l.b16 %v88
  %v118 = vunpack.c.l.b16 %v89
  %v119 = vunpack.c.l.b16 %v90
  %v120 = vpack.c.b16 %v117, %v116
  %v121 = vpack.c.b16 %v119, %v118
  %v125 = vsel %vm44, %v105, 0
  %127 = vmatprep.subr.bf16.mxu0 0
  %128 = vmatpush1.bf16.msra.mxu0 %v120
  %129 = vmatprep.subr.bf16.mxu0 0
  %130 = vmatpush1.bf16.msra.mxu0 %v121
  %131 = vmatprep.subr.bf16.mxu0 0
  %132 = vmatpush1.bf16.msra.mxu0 0
  %133 = vmatprep.subr.bf16.mxu0 0
  %134 = vmatpush1.bf16.msra.mxu0 0
  %135 = vmatprep.subr.bf16.mxu0 0
  %136 = vmatpush1.bf16.msra.mxu0 0
  %137 = vmatprep.subr.bf16.mxu0 0
  %138 = vmatpush1.bf16.msra.mxu0 0
  %139 = vmatprep.subr.bf16.mxu0 0
  %140 = vmatpush1.bf16.msra.mxu0 0
  %141 = vmatprep.subr.bf16.mxu0 0
  %142 = vmatpush1.bf16.msra.mxu0 0
  %143 = vmatprep.subr.bf16.mxu0 0
  %144 = vmatpush1.bf16.msra.mxu0 0
  %145 = vmatprep.subr.bf16.mxu0 0
  %146 = vmatpush1.bf16.msra.mxu0 0
  %147 = vmatprep.subr.bf16.mxu0 0
  %148 = vmatpush1.bf16.msra.mxu0 0
  %149 = vmatprep.subr.bf16.mxu0 0
  %150 = vmatpush1.bf16.msra.mxu0 0
  %151 = vmatprep.subr.bf16.mxu0 0
  %152 = vmatpush1.bf16.msra.mxu0 0
  %153 = vmatprep.subr.bf16.mxu0 0
  %154 = vmatpush1.bf16.msra.mxu0 0
  %155 = vmatprep.subr.bf16.mxu0 0
  %156 = vmatpush1.bf16.msra.mxu0 0
  %157 = vmatprep.subr.bf16.mxu0 0
  %158 = vmatpush1.bf16.msra.mxu0 0
  %159 = vmatprep.mubr.bf16.mxu0 0
  %160 = vmatmul.mubr.bf16.gmra.mrb[0].mxu0 %v125
  %v161 = vpop.f32.mrb[0].mxu0
  %v162 = vadd.f32 %v110, %v161
  %v163 = vpop.f32.mrb[0].mxu0
  %v164 = vpop.f32.mrb[0].mxu0
  %v165 = vadd.f32 %v110, %v164
  %v166 = vpop.f32.mrb[0].mxu0
  %167 = vdwg.mxu0
  %v168 = vpack.c.bf16 %v165, %v162
  %170 = vrot.lane.b32.xlu0 %v168, 96
  %v171 = vpop.permute.xlu0 %170
  %vm172 = vcmask 64512
  %v174 = vsel %vm172, %v168, 0
  %v177 = vsel %vm172, %v171, 0
  %179 = vmatprep.subr.bf16.mxu0 0
  %180 = vmatpush1.bf16.xpose.msra.mxu0 %v177
  %181 = vmatprep.subr.bf16.mxu0 0
  %182 = vmatpush1.bf16.xpose.msra.mxu0 0
  %183 = vmatprep.subr.bf16.mxu0 0
  %184 = vmatpush1.bf16.xpose.msra.mxu0 0
  %185 = vmatprep.subr.bf16.mxu0 0
  %186 = vmatpush1.bf16.xpose.msra.mxu0 0
  %187 = vmatprep.subr.bf16.mxu0 0
  %188 = vmatpush1.bf16.xpose.msra.mxu0 0
  %189 = vmatprep.subr.bf16.mxu0 0
  %190 = vmatpush1.bf16.xpose.msra.mxu0 0
  %191 = vmatprep.subr.bf16.mxu0 0
  %192 = vmatpush1.bf16.xpose.msra.mxu0 0
  %193 = vmatprep.subr.bf16.mxu0 0
  %194 = vmatpush1.bf16.xpose.msra.mxu0 0
  %195 = vmatprep.subr.bf16.mxu0 0
  %196 = vmatpush1.bf16.xpose.msra.mxu0 0
  %197 = vmatprep.subr.bf16.mxu0 0
  %198 = vmatpush1.bf16.xpose.msra.mxu0 0
  %199 = vmatprep.subr.bf16.mxu0 0
  %200 = vmatpush1.bf16.xpose.msra.mxu0 0
  %201 = vmatprep.subr.bf16.mxu0 0
  %202 = vmatpush1.bf16.xpose.msra.mxu0 0
  %203 = vmatprep.subr.bf16.mxu0 0
  %204 = vmatpush1.bf16.xpose.msra.mxu0 0
  %205 = vmatprep.subr.bf16.mxu0 0
  %206 = vmatpush1.bf16.xpose.msra.mxu0 0
  %207 = vmatprep.subr.bf16.mxu0 0
  %208 = vmatpush1.bf16.xpose.msra.mxu0 0
  %209 = vmatprep.subr.bf16.mxu0 0
  %210 = vmatpush1.bf16.xpose.msra.mxu0 0
  %211 = vmatprep.mubr.bf16.mxu0 0
  %212 = vmatmul.mubr.bf16.gmra.mrb[0].mxu0 %v174
  %v213 = vpop.f32.mrb[0].mxu0
  %v214 = vadd.f32 0.0, %v213
  %v215 = vpop.f32.mrb[0].mxu0
  %v216 = vpop.f32.mrb[0].mxu0
  %v217 = vadd.f32 0.0, %v216
  %v218 = vpop.f32.mrb[0].mxu0
  %219 = vdwg.mxu0
  %220 = vrot.lane.b32.xlu0 %v168, 120
  %v221 = vpop.permute.xlu0 %220
  %222 = vrot.lane.b32.xlu0 %v168, 88
  %v223 = vpop.permute.xlu0 %222
  %v225 = vsel %vm172, %v221, 0
  %v228 = vsel %vm172, %v223, 0
  %230 = vmatprep.subr.bf16.mxu0 0
  %231 = vmatpush1.bf16.xpose.msra.mxu0 %v228
  %232 = vmatprep.subr.bf16.mxu0 0
  %233 = vmatpush1.bf16.xpose.msra.mxu0 0
  %234 = vmatprep.subr.bf16.mxu0 0
  %235 = vmatpush1.bf16.xpose.msra.mxu0 0
  %236 = vmatprep.subr.bf16.mxu0 0
  %237 = vmatpush1.bf16.xpose.msra.mxu0 0
  %238 = vmatprep.subr.bf16.mxu0 0
  %239 = vmatpush1.bf16.xpose.msra.mxu0 0
  %240 = vmatprep.subr.bf16.mxu0 0
  %241 = vmatpush1.bf16.xpose.msra.mxu0 0
  %242 = vmatprep.subr.bf16.mxu0 0
  %243 = vmatpush1.bf16.xpose.msra.mxu0 0
  %244 = vmatprep.subr.bf16.mxu0 0
  %245 = vmatpush1.bf16.xpose.msra.mxu0 0
  %246 = vmatprep.subr.bf16.mxu0 0
  %247 = vmatpush1.bf16.xpose.msra.mxu0 0
  %248 = vmatprep.subr.bf16.mxu0 0
  %249 = vmatpush1.bf16.xpose.msra.mxu0 0
  %250 = vmatprep.subr.bf16.mxu0 0
  %251 = vmatpush1.bf16.xpose.msra.mxu0 0
  %252 = vmatprep.subr.bf16.mxu0 0
  %253 = vmatpush1.bf16.xpose.msra.mxu0 0
  %254 = vmatprep.subr.bf16.mxu0 0
  %255 = vmatpush1.bf16.xpose.msra.mxu0 0
  %256 = vmatprep.subr.bf16.mxu0 0
  %257 = vmatpush1.bf16.xpose.msra.mxu0 0
  %258 = vmatprep.subr.bf16.mxu0 0
  %259 = vmatpush1.bf16.xpose.msra.mxu0 0
  %260 = vmatprep.subr.bf16.mxu0 0
  %261 = vmatpush1.bf16.xpose.msra.mxu0 0
  %262 = vmatprep.mubr.bf16.mxu0 0
  %263 = vmatmul.mubr.bf16.gmra.mrb[0].mxu0 %v225
  %v264 = vpop.f32.mrb[0].mxu0
  %v265 = vadd.f32 0.0, %v264
  %v266 = vpop.f32.mrb[0].mxu0
  %v267 = vpop.f32.mrb[0].mxu0
  %v268 = vadd.f32 0.0, %v267
  %v269 = vpop.f32.mrb[0].mxu0
  %270 = vdwg.mxu0
  %271 = vrot.lane.b32.xlu0 %v168, 112
  %v272 = vpop.permute.xlu0 %271
  %273 = vrot.lane.b32.xlu0 %v168, 80
  %v274 = vpop.permute.xlu0 %273
  %v276 = vsel %vm172, %v272, 0
  %v279 = vsel %vm172, %v274, 0
  %281 = vmatprep.subr.bf16.mxu0 0
  %282 = vmatpush1.bf16.xpose.msra.mxu0 %v279
  %283 = vmatprep.subr.bf16.mxu0 0
  %284 = vmatpush1.bf16.xpose.msra.mxu0 0
  %285 = vmatprep.subr.bf16.mxu0 0
  %286 = vmatpush1.bf16.xpose.msra.mxu0 0
  %287 = vmatprep.subr.bf16.mxu0 0
  %288 = vmatpush1.bf16.xpose.msra.mxu0 0
  %289 = vmatprep.subr.bf16.mxu0 0
  %290 = vmatpush1.bf16.xpose.msra.mxu0 0
  %291 = vmatprep.subr.bf16.mxu0 0
  %292 = vmatpush1.bf16.xpose.msra.mxu0 0
  %293 = vmatprep.subr.bf16.mxu0 0
  %294 = vmatpush1.bf16.xpose.msra.mxu0 0
  %295 = vmatprep.subr.bf16.mxu0 0
  %296 = vmatpush1.bf16.xpose.msra.mxu0 0
  %297 = vmatprep.subr.bf16.mxu0 0
  %298 = vmatpush1.bf16.xpose.msra.mxu0 0
  %299 = vmatprep.subr.bf16.mxu0 0
  %300 = vmatpush1.bf16.xpose.msra.mxu0 0
  %301 = vmatprep.subr.bf16.mxu0 0
  %302 = vmatpush1.bf16.xpose.msra.mxu0 0
  %303 = vmatprep.subr.bf16.mxu0 0
  %304 = vmatpush1.bf16.xpose.msra.mxu0 0
  %305 = vmatprep.subr.bf16.mxu0 0
  %306 = vmatpush1.bf16.xpose.msra.mxu0 0
  %307 = vmatprep.subr.bf16.mxu0 0
  %308 = vmatpush1.bf16.xpose.msra.mxu0 0
  %309 = vmatprep.subr.bf16.mxu0 0
  %310 = vmatpush1.bf16.xpose.msra.mxu0 0
  %311 = vmatprep.subr.bf16.mxu0 0
  %312 = vmatpush1.bf16.xpose.msra.mxu0 0
  %313 = vmatprep.mubr.bf16.mxu0 0
  %314 = vmatmul.mubr.bf16.gmra.mrb[0].mxu0 %v276
  %v315 = vpop.f32.mrb[0].mxu0
  %v316 = vadd.f32 0.0, %v315
  %v317 = vpop.f32.mrb[0].mxu0
  %v318 = vpop.f32.mrb[0].mxu0
  %v319 = vadd.f32 0.0, %v318
  %v320 = vpop.f32.mrb[0].mxu0
  %321 = vdwg.mxu0
  %322 = vrot.lane.b32.xlu0 %v168, 104
  %v323 = vpop.permute.xlu0 %322
  %324 = vrot.lane.b32.xlu0 %v168, 72
  %v325 = vpop.permute.xlu0 %324
  %v327 = vsel %vm172, %v323, 0
  %v330 = vsel %vm172, %v325, 0
  %332 = vmatprep.subr.bf16.mxu0 0
  %333 = vmatpush1.bf16.xpose.msra.mxu0 %v330
  %334 = vmatprep.subr.bf16.mxu0 0
  %335 = vmatpush1.bf16.xpose.msra.mxu0 0
  %336 = vmatprep.subr.bf16.mxu0 0
  %337 = vmatpush1.bf16.xpose.msra.mxu0 0
  %338 = vmatprep.subr.bf16.mxu0 0
  %339 = vmatpush1.bf16.xpose.msra.mxu0 0
  %340 = vmatprep.subr.bf16.mxu0 0
  %341 = vmatpush1.bf16.xpose.msra.mxu0 0
  %342 = vmatprep.subr.bf16.mxu0 0
  %343 = vmatpush1.bf16.xpose.msra.mxu0 0
  %344 = vmatprep.subr.bf16.mxu0 0
  %345 = vmatpush1.bf16.xpose.msra.mxu0 0
  %346 = vmatprep.subr.bf16.mxu0 0
  %347 = vmatpush1.bf16.xpose.msra.mxu0 0
  %348 = vmatprep.subr.bf16.mxu0 0
  %349 = vmatpush1.bf16.xpose.msra.mxu0 0
  %350 = vmatprep.subr.bf16.mxu0 0
  %351 = vmatpush1.bf16.xpose.msra.mxu0 0
  %352 = vmatprep.subr.bf16.mxu0 0
  %353 = vmatpush1.bf16.xpose.msra.mxu0 0
  %354 = vmatprep.subr.bf16.mxu0 0
  %355 = vmatpush1.bf16.xpose.msra.mxu0 0
  %356 = vmatprep.subr.bf16.mxu0 0
  %357 = vmatpush1.bf16.xpose.msra.mxu0 0
  %358 = vmatprep.subr.bf16.mxu0 0
  %359 = vmatpush1.bf16.xpose.msra.mxu0 0
  %360 = vmatprep.subr.bf16.mxu0 0
  %361 = vmatpush1.bf16.xpose.msra.mxu0 0
  %362 = vmatprep.subr.bf16.mxu0 0
  %363 = vmatpush1.bf16.xpose.msra.mxu0 0
  %364 = vmatprep.mubr.bf16.mxu0 0
  %365 = vmatmul.mubr.bf16.gmra.mrb[0].mxu0 %v327
  %v366 = vpop.f32.mrb[0].mxu0
  %v367 = vadd.f32 0.0, %v366
  %v368 = vpop.f32.mrb[0].mxu0
  %v369 = vpop.f32.mrb[0].mxu0
  %v370 = vadd.f32 0.0, %v369
  %v371 = vpop.f32.mrb[0].mxu0
  %372 = vdwg.mxu0
  %v373 = vadd.f32 %v214, %v84
  %v374 = vadd.f32 %v217, %v85
  %v375 = vadd.f32 %v265, %v84
  %v376 = vadd.f32 %v268, %v85
  %v377 = vadd.f32 %v316, %v84
  %v378 = vadd.f32 %v319, %v85
  %v379 = vadd.f32 %v367, %v84
  %v380 = vadd.f32 %v370, %v85
  %vm381 = vcmask 130048
  %v382 = vsel %vm381, %v373, -inf
  %383 = vmax.xlane.f32.xlu0 %v382
  %v384 = vpop.xlane.xlu0 %383
  %v385 = vsel %vm381, %v374, -inf
  %386 = vmax.xlane.f32.xlu0 %v385
  %v387 = vpop.xlane.xlu0 %386
  %v388 = vsel %vm381, %v375, -inf
  %389 = vmax.xlane.f32.xlu0 %v388
  %v390 = vpop.xlane.xlu0 %389
  %v391 = vsel %vm381, %v376, -inf
  %392 = vmax.xlane.f32.xlu0 %v391
  %v393 = vpop.xlane.xlu0 %392
  %v394 = vsel %vm381, %v377, -inf
  %395 = vmax.xlane.f32.xlu0 %v394
  %v396 = vpop.xlane.xlu0 %395
  %v397 = vsel %vm381, %v378, -inf
  %398 = vmax.xlane.f32.xlu0 %v397
  %v399 = vpop.xlane.xlu0 %398
  %v400 = vsel %vm381, %v379, -inf
  %401 = vmax.xlane.f32.xlu0 %v400
  %v402 = vpop.xlane.xlu0 %401
  %v403 = vsel %vm381, %v380, -inf
  %404 = vmax.xlane.f32.xlu0 %v403
  %v405 = vpop.xlane.xlu0 %404
  %v406 = vsub.f32 %v373, %v384
  %v407 = vsub.f32 %v374, %v387
  %v408 = vsub.f32 %v375, %v390
  %v409 = vsub.f32 %v376, %v393
  %v410 = vsub.f32 %v377, %v396
  %v411 = vsub.f32 %v378, %v399
  %v412 = vsub.f32 %v379, %v402
  %v413 = vsub.f32 %v380, %v405
  %v414 = vmul.f32 %v406, 1.442695
  %v415 = vpow.pop %v414
  %v416 = vmul.f32 %v407, 1.442695
  %v417 = vpow.pop %v416
  %v418 = vmul.f32 %v408, 1.442695
  %v419 = vpow.pop %v418
  %v420 = vmul.f32 %v409, 1.442695
  %v421 = vpow.pop %v420
  %v422 = vmul.f32 %v410, 1.442695
  %v423 = vpow.pop %v422
  %v424 = vmul.f32 %v411, 1.442695
  %v425 = vpow.pop %v424
  %v426 = vmul.f32 %v412, 1.442695
  %v427 = vpow.pop %v426
  %v428 = vmul.f32 %v413, 1.442695
  %v429 = vpow.pop %v428
  %v430 = vsel %vm381, %v415, 0.0
  %431 = vadd.xlane.f32.xlu0 %v430
  %v432 = vpop.xlane.xlu0 %431
  %v433 = vsel %vm381, %v417, 0.0
  %434 = vadd.xlane.f32.xlu0 %v433
  %v435 = vpop.xlane.xlu0 %434
  %v436 = vsel %vm381, %v419, 0.0
  %437 = vadd.xlane.f32.xlu0 %v436
  %v438 = vpop.xlane.xlu0 %437
  %v439 = vsel %vm381, %v421, 0.0
  %440 = vadd.xlane.f32.xlu0 %v439
  %v441 = vpop.xlane.xlu0 %440
  %v442 = vsel %vm381, %v423, 0.0
  %443 = vadd.xlane.f32.xlu0 %v442
  %v444 = vpop.xlane.xlu0 %443
  %v445 = vsel %vm381, %v425, 0.0
  %446 = vadd.xlane.f32.xlu0 %v445
  %v447 = vpop.xlane.xlu0 %446
  %v448 = vsel %vm381, %v427, 0.0
  %449 = vadd.xlane.f32.xlu0 %v448
  %v450 = vpop.xlane.xlu0 %449
  %v451 = vsel %vm381, %v429, 0.0
  %452 = vadd.xlane.f32.xlu0 %v451
  %v453 = vpop.xlane.xlu0 %452
  %v454 = vrcp.pop %v432
  %v455 = vrcp.pop %v435
  %v456 = vrcp.pop %v438
  %v457 = vrcp.pop %v441
  %v458 = vrcp.pop %v444
  %v459 = vrcp.pop %v447
  %v460 = vrcp.pop %v450
  %v461 = vrcp.pop %v453
  %v462 = vmul.f32 %v415, %v454
  %v463 = vmul.f32 %v417, %v455
  %v464 = vmul.f32 %v419, %v456
  %v465 = vmul.f32 %v421, %v457
  %v466 = vmul.f32 %v423, %v458
  %v467 = vmul.f32 %v425, %v459
  %v468 = vmul.f32 %v427, %v460
  %v469 = vmul.f32 %v429, %v461
  %v470 = vpack.c.bf16 %v463, %v462
  %471 = vrot.lane.b32.xlu0 %v168, 64
  %v472 = vpop.permute.xlu0 %471
  %v475 = vsel %vm381, %v470, 0
  %477 = vmatprep.subr.bf16.mxu0 0
  %478 = vmatpush1.bf16.msra.mxu0 %v472
  %479 = vmatprep.subr.bf16.mxu0 0
  %480 = vmatpush1.bf16.msra.mxu0 0
  %481 = vmatprep.subr.bf16.mxu0 0
  %482 = vmatpush1.bf16.msra.mxu0 0
  %483 = vmatprep.subr.bf16.mxu0 0
  %484 = vmatpush1.bf16.msra.mxu0 0
  %485 = vmatprep.subr.bf16.mxu0 0
  %486 = vmatpush1.bf16.msra.mxu0 0
  %487 = vmatprep.subr.bf16.mxu0 0
  %488 = vmatpush1.bf16.msra.mxu0 0
  %489 = vmatprep.subr.bf16.mxu0 0
  %490 = vmatpush1.bf16.msra.mxu0 0
  %491 = vmatprep.subr.bf16.mxu0 0
  %492 = vmatpush1.bf16.msra.mxu0 0
  %493 = vmatprep.subr.bf16.mxu0 0
  %494 = vmatpush1.bf16.msra.mxu0 0
  %495 = vmatprep.subr.bf16.mxu0 0
  %496 = vmatpush1.bf16.msra.mxu0 0
  %497 = vmatprep.subr.bf16.mxu0 0
  %498 = vmatpush1.bf16.msra.mxu0 0
  %499 = vmatprep.subr.bf16.mxu0 0
  %500 = vmatpush1.bf16.msra.mxu0 0
  %501 = vmatprep.subr.bf16.mxu0 0
  %502 = vmatpush1.bf16.msra.mxu0 0
  %503 = vmatprep.subr.bf16.mxu0 0
  %504 = vmatpush1.bf16.msra.mxu0 0
  %505 = vmatprep.subr.bf16.mxu0 0
  %506 = vmatpush1.bf16.msra.mxu0 0
  %507 = vmatprep.subr.bf16.mxu0 0
  %508 = vmatpush1.bf16.msra.mxu0 0
  %509 = vmatprep.mubr.bf16.mxu0 0
  %510 = vmatmul.mubr.bf16.gmra.mrb[0].mxu0 %v475
  %v511 = vpop.f32.mrb[0].mxu0
  %v512 = vadd.f32 0.0, %v511
  %v513 = vpop.f32.mrb[0].mxu0
  %v514 = vpop.f32.mrb[0].mxu0
  %v515 = vadd.f32 0.0, %v514
  %v516 = vpop.f32.mrb[0].mxu0
  %517 = vdwg.mxu0
  %v518 = vpack.c.bf16 %v465, %v464
  %519 = vrot.lane.b32.xlu0 %v168, 56
  %v520 = vpop.permute.xlu0 %519
  %v523 = vsel %vm381, %v518, 0
  %525 = vmatprep.subr.bf16.mxu0 0
  %526 = vmatpush1.bf16.msra.mxu0 %v520
  %527 = vmatprep.subr.bf16.mxu0 0
  %528 = vmatpush1.bf16.msra.mxu0 0
  %529 = vmatprep.subr.bf16.mxu0 0
  %530 = vmatpush1.bf16.msra.mxu0 0
  %531 = vmatprep.subr.bf16.mxu0 0
  %532 = vmatpush1.bf16.msra.mxu0 0
  %533 = vmatprep.subr.bf16.mxu0 0
  %534 = vmatpush1.bf16.msra.mxu0 0
  %535 = vmatprep.subr.bf16.mxu0 0
  %536 = vmatpush1.bf16.msra.mxu0 0
  %537 = vmatprep.subr.bf16.mxu0 0
  %538 = vmatpush1.bf16.msra.mxu0 0
  %539 = vmatprep.subr.bf16.mxu0 0
  %540 = vmatpush1.bf16.msra.mxu0 0
  %541 = vmatprep.subr.bf16.mxu0 0
  %542 = vmatpush1.bf16.msra.mxu0 0
  %543 = vmatprep.subr.bf16.mxu0 0
  %544 = vmatpush1.bf16.msra.mxu0 0
  %545 = vmatprep.subr.bf16.mxu0 0
  %546 = vmatpush1.bf16.msra.mxu0 0
  %547 = vmatprep.subr.bf16.mxu0 0
  %548 = vmatpush1.bf16.msra.mxu0 0
  %549 = vmatprep.subr.bf16.mxu0 0
  %550 = vmatpush1.bf16.msra.mxu0 0
  %551 = vmatprep.subr.bf16.mxu0 0
  %552 = vmatpush1.bf16.msra.mxu0 0
  %553 = vmatprep.subr.bf16.mxu0 0
  %554 = vmatpush1.bf16.msra.mxu0 0
  %555 = vmatprep.subr.bf16.mxu0 0
  %556 = vmatpush1.bf16.msra.mxu0 0
  %557 = vmatprep.mubr.bf16.mxu0 0
  %558 = vmatmul.mubr.bf16.gmra.mrb[0].mxu0 %v523
  %v559 = vpop.f32.mrb[0].mxu0
  %v560 = vadd.f32 0.0, %v559
  %v561 = vpop.f32.mrb[0].mxu0
  %v562 = vpop.f32.mrb[0].mxu0
  %v563 = vadd.f32 0.0, %v562
  %v564 = vpop.f32.mrb[0].mxu0
  %565 = vdwg.mxu0
  %v566 = vpack.c.bf16 %v467, %v466
  %567 = vrot.lane.b32.xlu0 %v168, 48
  %v568 = vpop.permute.xlu0 %567
  %v571 = vsel %vm381, %v566, 0
  %573 = vmatprep.subr.bf16.mxu0 0
  %574 = vmatpush1.bf16.msra.mxu0 %v568
  %575 = vmatprep.subr.bf16.mxu0 0
  %576 = vmatpush1.bf16.msra.mxu0 0
  %577 = vmatprep.subr.bf16.mxu0 0
  %578 = vmatpush1.bf16.msra.mxu0 0
  %579 = vmatprep.subr.bf16.mxu0 0
  %580 = vmatpush1.bf16.msra.mxu0 0
  %581 = vmatprep.subr.bf16.mxu0 0
  %582 = vmatpush1.bf16.msra.mxu0 0
  %583 = vmatprep.subr.bf16.mxu0 0
  %584 = vmatpush1.bf16.msra.mxu0 0
  %585 = vmatprep.subr.bf16.mxu0 0
  %586 = vmatpush1.bf16.msra.mxu0 0
  %587 = vmatprep.subr.bf16.mxu0 0
  %588 = vmatpush1.bf16.msra.mxu0 0
  %589 = vmatprep.subr.bf16.mxu0 0
  %590 = vmatpush1.bf16.msra.mxu0 0
  %591 = vmatprep.subr.bf16.mxu0 0
  %592 = vmatpush1.bf16.msra.mxu0 0
  %593 = vmatprep.subr.bf16.mxu0 0
  %594 = vmatpush1.bf16.msra.mxu0 0
  %595 = vmatprep.subr.bf16.mxu0 0
  %596 = vmatpush1.bf16.msra.mxu0 0
  %597 = vmatprep.subr.bf16.mxu0 0
  %598 = vmatpush1.bf16.msra.mxu0 0
  %599 = vmatprep.subr.bf16.mxu0 0
  %600 = vmatpush1.bf16.msra.mxu0 0
  %601 = vmatprep.subr.bf16.mxu0 0
  %602 = vmatpush1.bf16.msra.mxu0 0
  %603 = vmatprep.subr.bf16.mxu0 0
  %604 = vmatpush1.bf16.msra.mxu0 0
  %605 = vmatprep.mubr.bf16.mxu0 0
  %606 = vmatmul.mubr.bf16.gmra.mrb[0].mxu0 %v571
  %v607 = vpop.f32.mrb[0].mxu0
  %v608 = vadd.f32 0.0, %v607
  %v609 = vpop.f32.mrb[0].mxu0
  %v610 = vpop.f32.mrb[0].mxu0
  %v611 = vadd.f32 0.0, %v610
  %v612 = vpop.f32.mrb[0].mxu0
  %613 = vdwg.mxu0
  %v614 = vpack.c.bf16 %v469, %v468
  %615 = vrot.lane.b32.xlu0 %v168, 40
  %v616 = vpop.permute.xlu0 %615
  %v619 = vsel %vm381, %v614, 0
  %621 = vmatprep.subr.bf16.mxu0 0
  %622 = vmatpush1.bf16.msra.mxu0 %v616
  %623 = vmatprep.subr.bf16.mxu0 0
  %624 = vmatpush1.bf16.msra.mxu0 0
  %625 = vmatprep.subr.bf16.mxu0 0
  %626 = vmatpush1.bf16.msra.mxu0 0
  %627 = vmatprep.subr.bf16.mxu0 0
  %628 = vmatpush1.bf16.msra.mxu0 0
  %629 = vmatprep.subr.bf16.mxu0 0
  %630 = vmatpush1.bf16.msra.mxu0 0
  %631 = vmatprep.subr.bf16.mxu0 0
  %632 = vmatpush1.bf16.msra.mxu0 0
  %633 = vmatprep.subr.bf16.mxu0 0
  %634 = vmatpush1.bf16.msra.mxu0 0
  %635 = vmatprep.subr.bf16.mxu0 0
  %636 = vmatpush1.bf16.msra.mxu0 0
  %637 = vmatprep.subr.bf16.mxu0 0
  %638 = vmatpush1.bf16.msra.mxu0 0
  %639 = vmatprep.subr.bf16.mxu0 0
  %640 = vmatpush1.bf16.msra.mxu0 0
  %641 = vmatprep.subr.bf16.mxu0 0
  %642 = vmatpush1.bf16.msra.mxu0 0
  %643 = vmatprep.subr.bf16.mxu0 0
  %644 = vmatpush1.bf16.msra.mxu0 0
  %645 = vmatprep.subr.bf16.mxu0 0
  %646 = vmatpush1.bf16.msra.mxu0 0
  %647 = vmatprep.subr.bf16.mxu0 0
  %648 = vmatpush1.bf16.msra.mxu0 0
  %649 = vmatprep.subr.bf16.mxu0 0
  %650 = vmatpush1.bf16.msra.mxu0 0
  %651 = vmatprep.subr.bf16.mxu0 0
  %652 = vmatpush1.bf16.msra.mxu0 0
  %653 = vmatprep.mubr.bf16.mxu0 0
  %654 = vmatmul.mubr.bf16.gmra.mrb[0].mxu0 %v619
  %v655 = vpop.f32.mrb[0].mxu0
  %v656 = vadd.f32 0.0, %v655
  %v657 = vpop.f32.mrb[0].mxu0
  %v658 = vpop.f32.mrb[0].mxu0
  %v659 = vadd.f32 0.0, %v658
  %v660 = vpop.f32.mrb[0].mxu0
  %661 = vdwg.mxu0
  %664 = vrot.lane.b32.xlu0 %v560, 8
  %v665 = vpop.permute.xlu0 %664
  %666 = vrot.lane.b32.xlu0 %v563, 8
  %v667 = vpop.permute.xlu0 %666
  %672 = vrot.lane.b32.xlu0 %v608, 16
  %v673 = vpop.permute.xlu0 %672
  %674 = vrot.lane.b32.xlu0 %v611, 16
  %v675 = vpop.permute.xlu0 %674
  %680 = vrot.lane.b32.xlu0 %v656, 24
  %v681 = vpop.permute.xlu0 %680
  %682 = vrot.lane.b32.xlu0 %v659, 24
  %v683 = vpop.permute.xlu0 %682
  %v686 = vsel %vm172, %v512, %v665
  %v687 = vsel %vm172, %v515, %v667
  %v688 = vsel %vm381, %v686, %v673
  %v689 = vsel %vm381, %v687, %v675
  %vm690 = vcmask 195584
  %v691 = vsel %vm690, %v688, %v681
  %v692 = vsel %vm690, %v689, %v683
  %v693 = vpack.c.bf16 %v692, %v691
  %v694 = vlaneseq
  %v695 = vshrl.u32 %v694, 7
  %v696 = vsub.s32 0, %v695
  %v697 = vrot.slane %v86, %v696
  %698 = vrot.lane.b32.xlu0 %v120, 32
  %v699 = vpop.permute.xlu0 %698
  %700 = vrot.lane.b32.xlu0 %v121, 32
  %v701 = vpop.permute.xlu0 %700
  %v705 = vsel %vm44, %v693, 0
  %707 = vmatprep.subr.bf16.mxu0 0
  %708 = vmatpush1.bf16.msra.mxu0 %v699
  %709 = vmatprep.subr.bf16.mxu0 0
  %710 = vmatpush1.bf16.msra.mxu0 %v701
  %711 = vmatprep.subr.bf16.mxu0 0
  %712 = vmatpush1.bf16.msra.mxu0 0
  %713 = vmatprep.subr.bf16.mxu0 0
  %714 = vmatpush1.bf16.msra.mxu0 0
  %715 = vmatprep.subr.bf16.mxu0 0
  %716 = vmatpush1.bf16.msra.mxu0 0
  %717 = vmatprep.subr.bf16.mxu0 0
  %718 = vmatpush1.bf16.msra.mxu0 0
  %719 = vmatprep.subr.bf16.mxu0 0
  %720 = vmatpush1.bf16.msra.mxu0 0
  %721 = vmatprep.subr.bf16.mxu0 0
  %722 = vmatpush1.bf16.msra.mxu0 0
  %723 = vmatprep.subr.bf16.mxu0 0
  %724 = vmatpush1.bf16.msra.mxu0 0
  %725 = vmatprep.subr.bf16.mxu0 0
  %726 = vmatpush1.bf16.msra.mxu0 0
  %727 = vmatprep.subr.bf16.mxu0 0
  %728 = vmatpush1.bf16.msra.mxu0 0
  %729 = vmatprep.subr.bf16.mxu0 0
  %730 = vmatpush1.bf16.msra.mxu0 0
  %731 = vmatprep.subr.bf16.mxu0 0
  %732 = vmatpush1.bf16.msra.mxu0 0
  %733 = vmatprep.subr.bf16.mxu0 0
  %734 = vmatpush1.bf16.msra.mxu0 0
  %735 = vmatprep.subr.bf16.mxu0 0
  %736 = vmatpush1.bf16.msra.mxu0 0
  %737 = vmatprep.subr.bf16.mxu0 0
  %738 = vmatpush1.bf16.msra.mxu0 0
  %739 = vmatprep.mubr.bf16.mxu0 0
  %740 = vmatmul.mubr.bf16.gmra.mrb[0].mxu0 %v705
  %v741 = vpop.f32.mrb[0].mxu0
  %v742 = vadd.f32 %v697, %v741
  %v743 = vpop.f32.mrb[0].mxu0
  %v744 = vpop.f32.mrb[0].mxu0
  %v745 = vadd.f32 %v697, %v744
  %v746 = vpop.f32.mrb[0].mxu0
  %747 = vdwg.mxu0
  %v748 = vadd.f32 %v82, %v742
  %v749 = vadd.f32 %v83, %v745
  %v750 = vsel %vm44, %v748, 0.0
  %751 = vadd.xlane.f32.xlu0 %v750
  %v752 = vpop.xlane.xlu0 %751
  %v753 = vsel %vm44, %v749, 0.0
  %754 = vadd.xlane.f32.xlu0 %v753
  %v755 = vpop.xlane.xlu0 %754
  %v756 = vmul.f32 %v752, %v51
  %v757 = vmul.f32 %v755, %v51
  %v758 = vsub.f32 %v748, %v756
  %v759 = vsub.f32 %v749, %v757
  %v760 = vmul.f32 %v758, %v758
  %v761 = vmul.f32 %v759, %v759
  %v762 = vsel %vm44, %v760, 0.0
  %763 = vadd.xlane.f32.xlu0 %v762
  %v764 = vpop.xlane.xlu0 %763
  %v765 = vsel %vm44, %v761, 0.0
  %766 = vadd.xlane.f32.xlu0 %v765
  %v767 = vpop.xlane.xlu0 %766
  %v768 = vmul.f32 %v764, %v51
  %v769 = vmul.f32 %v767, %v51
  %v770 = vadd.f32 %v768, 1e-12
  %v771 = vadd.f32 %v769, 1e-12
  %v772 = vrsqrt.pop %v770
  %v773 = vrsqrt.pop %v771
  %v774 = vmul.f32 %v758, %v772
  %v775 = vmul.f32 %v759, %v773
  %v776 = vlaneseq
  %v777 = vshrl.u32 %v776, 7
  %v778 = vsub.s32 1, %v777
  %v779 = vrot.slane %v86, %v778
  %v780 = vmul.f32 %v774, %v779
  %v781 = vmul.f32 %v775, %v779
  %v782 = vlaneseq
  %v783 = vshrl.u32 %v782, 7
  %v784 = vsub.s32 2, %v783
  %v785 = vrot.slane %v86, %v784
  %v786 = vadd.f32 %v780, %v785
  %v787 = vadd.f32 %v781, %v785
  %v788 = vpack.c.bf16 %v787, %v786
  %v790 = vlaneseq
  %v791 = vshrl.u32 %v790, 7
  %v792 = vsub.s32 0, %v791
  %v793 = vrot.slane %v92, %v792
  %v799 = vunpack.c.l.b16 %v93
  %v800 = vunpack.c.l.b16 %v94
  %v801 = vunpack.c.l.b16 %v95
  %v802 = vunpack.c.l.b16 %v96
  %v803 = vpack.c.b16 %v800, %v799
  %v804 = vpack.c.b16 %v802, %v801
  %v808 = vsel %vm44, %v788, 0
  %810 = vmatprep.subr.bf16.mxu0 0
  %811 = vmatpush1.bf16.msra.mxu0 %v803
  %812 = vmatprep.subr.bf16.mxu0 0
  %813 = vmatpush1.bf16.msra.mxu0 %v804
  %814 = vmatprep.subr.bf16.mxu0 0
  %815 = vmatpush1.bf16.msra.mxu0 0
  %816 = vmatprep.subr.bf16.mxu0 0
  %817 = vmatpush1.bf16.msra.mxu0 0
  %818 = vmatprep.subr.bf16.mxu0 0
  %819 = vmatpush1.bf16.msra.mxu0 0
  %820 = vmatprep.subr.bf16.mxu0 0
  %821 = vmatpush1.bf16.msra.mxu0 0
  %822 = vmatprep.subr.bf16.mxu0 0
  %823 = vmatpush1.bf16.msra.mxu0 0
  %824 = vmatprep.subr.bf16.mxu0 0
  %825 = vmatpush1.bf16.msra.mxu0 0
  %826 = vmatprep.subr.bf16.mxu0 0
  %827 = vmatpush1.bf16.msra.mxu0 0
  %828 = vmatprep.subr.bf16.mxu0 0
  %829 = vmatpush1.bf16.msra.mxu0 0
  %830 = vmatprep.subr.bf16.mxu0 0
  %831 = vmatpush1.bf16.msra.mxu0 0
  %832 = vmatprep.subr.bf16.mxu0 0
  %833 = vmatpush1.bf16.msra.mxu0 0
  %834 = vmatprep.subr.bf16.mxu0 0
  %835 = vmatpush1.bf16.msra.mxu0 0
  %836 = vmatprep.subr.bf16.mxu0 0
  %837 = vmatpush1.bf16.msra.mxu0 0
  %838 = vmatprep.subr.bf16.mxu0 0
  %839 = vmatpush1.bf16.msra.mxu0 0
  %840 = vmatprep.subr.bf16.mxu0 0
  %841 = vmatpush1.bf16.msra.mxu0 0
  %842 = vmatprep.mubr.bf16.mxu0 0
  %843 = vmatmul.mubr.bf16.gmra.mrb[0].mxu0 %v808
  %v844 = vpop.f32.mrb[0].mxu0
  %v845 = vadd.f32 %v793, %v844
  %v846 = vpop.f32.mrb[0].mxu0
  %v847 = vpop.f32.mrb[0].mxu0
  %v848 = vadd.f32 %v793, %v847
  %v849 = vpop.f32.mrb[0].mxu0
  %850 = vdwg.mxu0
  %v851 = vmul.f32 %v845, 0.5
  %v852 = vmul.f32 %v848, 0.5
  %v853 = vmul.f32 %v845, 0.044715
  %v854 = vmul.f32 %v848, 0.044715
  %v855 = vmul.f32 %v853, %v845
  %v856 = vmul.f32 %v854, %v848
  %v857 = vmul.f32 %v855, %v845
  %v858 = vmul.f32 %v856, %v848
  %v859 = vadd.f32 %v845, %v857
  %v860 = vadd.f32 %v848, %v858
  %v861 = vmul.f32 %v859, 0.7978846
  %v862 = vmul.f32 %v860, 0.7978846
  %v863 = vtanh.pop %v861
  %v864 = vtanh.pop %v862
  %v865 = vadd.f32 %v863, 1.0
  %v866 = vadd.f32 %v864, 1.0
  %v867 = vmul.f32 %v851, %v865
  %v868 = vmul.f32 %v852, %v866
  %v869 = vpack.c.bf16 %v868, %v867
  %v870 = vlaneseq
  %v871 = vshrl.u32 %v870, 7
  %v872 = vsub.s32 3, %v871
  %v873 = vrot.slane %v86, %v872
  %v882 = vunpack.c.l.b16 %v97
  %v883 = vunpack.c.l.b16 %v98
  %v884 = vunpack.c.l.b16 %v99
  %v885 = vunpack.c.l.b16 %v100
  %v886 = vunpack.c.l.b16 %v101
  %v887 = vunpack.c.l.b16 %v102
  %v888 = vunpack.c.l.b16 %v103
  %v889 = vunpack.c.l.b16 %v104
  %v890 = vpack.c.b16 %v883, %v882
  %v891 = vpack.c.b16 %v885, %v884
  %v892 = vpack.c.b16 %v887, %v886
  %v893 = vpack.c.b16 %v889, %v888
  %vm898 = vcmask 523264
  %v900 = vsel %vm898, %v869, 0
  %902 = vmatprep.subr.bf16.mxu0 0
  %903 = vmatpush1.bf16.msra.mxu0 %v890
  %904 = vmatprep.subr.bf16.mxu0 0
  %905 = vmatpush1.bf16.msra.mxu0 %v891
  %906 = vmatprep.subr.bf16.mxu0 0
  %907 = vmatpush1.bf16.msra.mxu0 %v892
  %908 = vmatprep.subr.bf16.mxu0 0
  %909 = vmatpush1.bf16.msra.mxu0 %v893
  %910 = vmatprep.subr.bf16.mxu0 0
  %911 = vmatpush1.bf16.msra.mxu0 0
  %912 = vmatprep.subr.bf16.mxu0 0
  %913 = vmatpush1.bf16.msra.mxu0 0
  %914 = vmatprep.subr.bf16.mxu0 0
  %915 = vmatpush1.bf16.msra.mxu0 0
  %916 = vmatprep.subr.bf16.mxu0 0
  %917 = vmatpush1.bf16.msra.mxu0 0
  %918 = vmatprep.subr.bf16.mxu0 0
  %919 = vmatpush1.bf16.msra.mxu0 0
  %920 = vmatprep.subr.bf16.mxu0 0
  %921 = vmatpush1.bf16.msra.mxu0 0
  %922 = vmatprep.subr.bf16.mxu0 0
  %923 = vmatpush1.bf16.msra.mxu0 0
  %924 = vmatprep.subr.bf16.mxu0 0
  %925 = vmatpush1.bf16.msra.mxu0 0
  %926 = vmatprep.subr.bf16.mxu0 0
  %927 = vmatpush1.bf16.msra.mxu0 0
  %928 = vmatprep.subr.bf16.mxu0 0
  %929 = vmatpush1.bf16.msra.mxu0 0
  %930 = vmatprep.subr.bf16.mxu0 0
  %931 = vmatpush1.bf16.msra.mxu0 0
  %932 = vmatprep.subr.bf16.mxu0 0
  %933 = vmatpush1.bf16.msra.mxu0 0
  %934 = vmatprep.mubr.bf16.mxu0 0
  %935 = vmatmul.mubr.bf16.gmra.mrb[0].mxu0 %v900
  %v936 = vpop.f32.mrb[0].mxu0
  %v937 = vadd.f32 %v873, %v936
  %v938 = vpop.f32.mrb[0].mxu0
  %v939 = vpop.f32.mrb[0].mxu0
  %v940 = vadd.f32 %v873, %v939
  %v941 = vpop.f32.mrb[0].mxu0
  %942 = vdwg.mxu0
  %v943 = vadd.f32 %v786, %v937
  %v944 = vadd.f32 %v787, %v940
  %v945 = vsel %vm44, %v943, 0.0
  %946 = vadd.xlane.f32.xlu0 %v945
  %v947 = vpop.xlane.xlu0 %946
  %v948 = vsel %vm44, %v944, 0.0
  %949 = vadd.xlane.f32.xlu0 %v948
  %v950 = vpop.xlane.xlu0 %949
  %v951 = vmul.f32 %v947, %v51
  %v952 = vmul.f32 %v950, %v51
  %v953 = vsub.f32 %v943, %v951
  %v954 = vsub.f32 %v944, %v952
  %v955 = vmul.f32 %v953, %v953
  %v956 = vmul.f32 %v954, %v954
  %v957 = vsel %vm44, %v955, 0.0
  %958 = vadd.xlane.f32.xlu0 %v957
  %v959 = vpop.xlane.xlu0 %958
  %v960 = vsel %vm44, %v956, 0.0
  %961 = vadd.xlane.f32.xlu0 %v960
  %v962 = vpop.xlane.xlu0 %961
  %v963 = vmul.f32 %v959, %v51
  %v964 = vmul.f32 %v962, %v51
  %v965 = vadd.f32 %v963, 1e-12
  %v966 = vadd.f32 %v964, 1e-12
  %v967 = vrsqrt.pop %v965
  %v968 = vrsqrt.pop %v966
  %v969 = vmul.f32 %v953, %v967
  %v970 = vmul.f32 %v954, %v968
  %v971 = vlaneseq
  %v972 = vshrl.u32 %v971, 7
  %v973 = vsub.s32 4, %v972
  %v974 = vrot.slane %v86, %v973
  %v975 = vmul.f32 %v969, %v974
  %v976 = vmul.f32 %v970, %v974
  %v977 = vlaneseq
  %v978 = vshrl.u32 %v977, 7
  %v979 = vsub.s32 5, %v978
  %v980 = vrot.slane %v86, %v979
  %v981 = vadd.f32 %v975, %v980
  %v982 = vadd.f32 %v976, %v980
  %s983 = scalar_lea.vmem %s7, 8
  %v984 = vld [vmem:[%s983] sm:$0x3f]
  %s985 = scalar_lea.vmem %s3, 16
  %v986 = vld [vmem:[%s985] sm:$0xf]
  %v987 = vld [vmem:[%s985 + $0x4] sm:$0xf]
  %v988 = vld [vmem:[%s985 + $0x8] sm:$0xf]
  %v989 = vld [vmem:[%s985 + $0xc] sm:$0xf]
  %s990 = scalar_lea.vmem %s4, 1
  %v991 = vld [vmem:[%s990] sm:$0x1]
  %s992 = scalar_lea.vmem %s8, 1
  %v993 = vld [vmem:[%s992] sm:$0x1]
  %s994 = scalar_lea.vmem %s5, 16
  %v995 = vld [vmem:[%s994] sm:$0xf]
  %v996 = vld [vmem:[%s994 + $0x4] sm:$0xf]
  %v997 = vld [vmem:[%s994 + $0x8] sm:$0xf]
  %v998 = vld [vmem:[%s994 + $0xc] sm:$0xf]
  %s999 = scalar_lea.vmem %s6, 32
  %v1000 = vld [vmem:[%s999] sm:$0xf]
  %v1001 = vld [vmem:[%s999 + $0x4] sm:$0xf]
  %v1002 = vld [vmem:[%s999 + $0x8] sm:$0xf]
  %v1003 = vld [vmem:[%s999 + $0xc] sm:$0xf]
  %v1004 = vld [vmem:[%s999 + $0x10] sm:$0xf]
  %v1005 = vld [vmem:[%s999 + $0x14] sm:$0xf]
  %v1006 = vld [vmem:[%s999 + $0x18] sm:$0xf]
  %v1007 = vld [vmem:[%s999 + $0x1c] sm:$0xf]
  %v1008 = vpack.c.bf16 %v982, %v981
  %v1010 = vlaneseq
  %v1011 = vshrl.u32 %v1010, 7
  %v1012 = vsub.s32 0, %v1011
  %v1013 = vrot.slane %v991, %v1012
  %v1019 = vunpack.c.l.b16 %v986
  %v1020 = vunpack.c.l.b16 %v987
  %v1021 = vunpack.c.l.b16 %v988
  %v1022 = vunpack.c.l.b16 %v989
  %v1023 = vpack.c.b16 %v1020, %v1019
  %v1024 = vpack.c.b16 %v1022, %v1021
  %v1028 = vsel %vm44, %v1008, 0
  %1030 = vmatprep.subr.bf16.mxu0 0
  %1031 = vmatpush1.bf16.msra.mxu0 %v1023
  %1032 = vmatprep.subr.bf16.mxu0 0
  %1033 = vmatpush1.bf16.msra.mxu0 %v1024
  %1034 = vmatprep.subr.bf16.mxu0 0
  %1035 = vmatpush1.bf16.msra.mxu0 0
  %1036 = vmatprep.subr.bf16.mxu0 0
  %1037 = vmatpush1.bf16.msra.mxu0 0
  %1038 = vmatprep.subr.bf16.mxu0 0
  %1039 = vmatpush1.bf16.msra.mxu0 0
  %1040 = vmatprep.subr.bf16.mxu0 0
  %1041 = vmatpush1.bf16.msra.mxu0 0
  %1042 = vmatprep.subr.bf16.mxu0 0
  %1043 = vmatpush1.bf16.msra.mxu0 0
  %1044 = vmatprep.subr.bf16.mxu0 0
  %1045 = vmatpush1.bf16.msra.mxu0 0
  %1046 = vmatprep.subr.bf16.mxu0 0
  %1047 = vmatpush1.bf16.msra.mxu0 0
  %1048 = vmatprep.subr.bf16.mxu0 0
  %1049 = vmatpush1.bf16.msra.mxu0 0
  %1050 = vmatprep.subr.bf16.mxu0 0
  %1051 = vmatpush1.bf16.msra.mxu0 0
  %1052 = vmatprep.subr.bf16.mxu0 0
  %1053 = vmatpush1.bf16.msra.mxu0 0
  %1054 = vmatprep.subr.bf16.mxu0 0
  %1055 = vmatpush1.bf16.msra.mxu0 0
  %1056 = vmatprep.subr.bf16.mxu0 0
  %1057 = vmatpush1.bf16.msra.mxu0 0
  %1058 = vmatprep.subr.bf16.mxu0 0
  %1059 = vmatpush1.bf16.msra.mxu0 0
  %1060 = vmatprep.subr.bf16.mxu0 0
  %1061 = vmatpush1.bf16.msra.mxu0 0
  %1062 = vmatprep.mubr.bf16.mxu0 0
  %1063 = vmatmul.mubr.bf16.gmra.mrb[0].mxu0 %v1028
  %v1064 = vpop.f32.mrb[0].mxu0
  %v1065 = vadd.f32 %v1013, %v1064
  %v1066 = vpop.f32.mrb[0].mxu0
  %v1067 = vpop.f32.mrb[0].mxu0
  %v1068 = vadd.f32 %v1013, %v1067
  %v1069 = vpop.f32.mrb[0].mxu0
  %1070 = vdwg.mxu0
  %v1071 = vpack.c.bf16 %v1068, %v1065
  %1073 = vrot.lane.b32.xlu0 %v1071, 96
  %v1074 = vpop.permute.xlu0 %1073
  %v1076 = vsel %vm172, %v1071, 0
  %v1079 = vsel %vm172, %v1074, 0
  %1081 = vmatprep.subr.bf16.mxu0 0
  %1082 = vmatpush1.bf16.xpose.msra.mxu0 %v1079
  %1083 = vmatprep.subr.bf16.mxu0 0
  %1084 = vmatpush1.bf16.xpose.msra.mxu0 0
  %1085 = vmatprep.subr.bf16.mxu0 0
  %1086 = vmatpush1.bf16.xpose.msra.mxu0 0
  %1087 = vmatprep.subr.bf16.mxu0 0
  %1088 = vmatpush1.bf16.xpose.msra.mxu0 0
  %1089 = vmatprep.subr.bf16.mxu0 0
  %1090 = vmatpush1.bf16.xpose.msra.mxu0 0
  %1091 = vmatprep.subr.bf16.mxu0 0
  %1092 = vmatpush1.bf16.xpose.msra.mxu0 0
  %1093 = vmatprep.subr.bf16.mxu0 0
  %1094 = vmatpush1.bf16.xpose.msra.mxu0 0
  %1095 = vmatprep.subr.bf16.mxu0 0
  %1096 = vmatpush1.bf16.xpose.msra.mxu0 0
  %1097 = vmatprep.subr.bf16.mxu0 0
  %1098 = vmatpush1.bf16.xpose.msra.mxu0 0
  %1099 = vmatprep.subr.bf16.mxu0 0
  %1100 = vmatpush1.bf16.xpose.msra.mxu0 0
  %1101 = vmatprep.subr.bf16.mxu0 0
  %1102 = vmatpush1.bf16.xpose.msra.mxu0 0
  %1103 = vmatprep.subr.bf16.mxu0 0
  %1104 = vmatpush1.bf16.xpose.msra.mxu0 0
  %1105 = vmatprep.subr.bf16.mxu0 0
  %1106 = vmatpush1.bf16.xpose.msra.mxu0 0
  %1107 = vmatprep.subr.bf16.mxu0 0
  %1108 = vmatpush1.bf16.xpose.msra.mxu0 0
  %1109 = vmatprep.subr.bf16.mxu0 0
  %1110 = vmatpush1.bf16.xpose.msra.mxu0 0
  %1111 = vmatprep.subr.bf16.mxu0 0
  %1112 = vmatpush1.bf16.xpose.msra.mxu0 0
  %1113 = vmatprep.mubr.bf16.mxu0 0
  %1114 = vmatmul.mubr.bf16.gmra.mrb[0].mxu0 %v1076
  %v1115 = vpop.f32.mrb[0].mxu0
  %v1116 = vadd.f32 0.0, %v1115
  %v1117 = vpop.f32.mrb[0].mxu0
  %v1118 = vpop.f32.mrb[0].mxu0
  %v1119 = vadd.f32 0.0, %v1118
  %v1120 = vpop.f32.mrb[0].mxu0
  %1121 = vdwg.mxu0
  %1122 = vrot.lane.b32.xlu0 %v1071, 120
  %v1123 = vpop.permute.xlu0 %1122
  %1124 = vrot.lane.b32.xlu0 %v1071, 88
  %v1125 = vpop.permute.xlu0 %1124
  %v1127 = vsel %vm172, %v1123, 0
  %v1130 = vsel %vm172, %v1125, 0
  %1132 = vmatprep.subr.bf16.mxu0 0
  %1133 = vmatpush1.bf16.xpose.msra.mxu0 %v1130
  %1134 = vmatprep.subr.bf16.mxu0 0
  %1135 = vmatpush1.bf16.xpose.msra.mxu0 0
  %1136 = vmatprep.subr.bf16.mxu0 0
  %1137 = vmatpush1.bf16.xpose.msra.mxu0 0
  %1138 = vmatprep.subr.bf16.mxu0 0
  %1139 = vmatpush1.bf16.xpose.msra.mxu0 0
  %1140 = vmatprep.subr.bf16.mxu0 0
  %1141 = vmatpush1.bf16.xpose.msra.mxu0 0
  %1142 = vmatprep.subr.bf16.mxu0 0
  %1143 = vmatpush1.bf16.xpose.msra.mxu0 0
  %1144 = vmatprep.subr.bf16.mxu0 0
  %1145 = vmatpush1.bf16.xpose.msra.mxu0 0
  %1146 = vmatprep.subr.bf16.mxu0 0
  %1147 = vmatpush1.bf16.xpose.msra.mxu0 0
  %1148 = vmatprep.subr.bf16.mxu0 0
  %1149 = vmatpush1.bf16.xpose.msra.mxu0 0
  %1150 = vmatprep.subr.bf16.mxu0 0
  %1151 = vmatpush1.bf16.xpose.msra.mxu0 0
  %1152 = vmatprep.subr.bf16.mxu0 0
  %1153 = vmatpush1.bf16.xpose.msra.mxu0 0
  %1154 = vmatprep.subr.bf16.mxu0 0
  %1155 = vmatpush1.bf16.xpose.msra.mxu0 0
  %1156 = vmatprep.subr.bf16.mxu0 0
  %1157 = vmatpush1.bf16.xpose.msra.mxu0 0
  %1158 = vmatprep.subr.bf16.mxu0 0
  %1159 = vmatpush1.bf16.xpose.msra.mxu0 0
  %1160 = vmatprep.subr.bf16.mxu0 0
  %1161 = vmatpush1.bf16.xpose.msra.mxu0 0
  %1162 = vmatprep.subr.bf16.mxu0 0
  %1163 = vmatpush1.bf16.xpose.msra.mxu0 0
  %1164 = vmatprep.mubr.bf16.mxu0 0
  %1165 = vmatmul.mubr.bf16.gmra.mrb[0].mxu0 %v1127
  %v1166 = vpop.f32.mrb[0].mxu0
  %v1167 = vadd.f32 0.0, %v1166
  %v1168 = vpop.f32.mrb[0].mxu0
  %v1169 = vpop.f32.mrb[0].mxu0
  %v1170 = vadd.f32 0.0, %v1169
  %v1171 = vpop.f32.mrb[0].mxu0
  %1172 = vdwg.mxu0
  %1173 = vrot.lane.b32.xlu0 %v1071, 112
  %v1174 = vpop.permute.xlu0 %1173
  %1175 = vrot.lane.b32.xlu0 %v1071, 80
  %v1176 = vpop.permute.xlu0 %1175
  %v1178 = vsel %vm172, %v1174, 0
  %v1181 = vsel %vm172, %v1176, 0
  %1183 = vmatprep.subr.bf16.mxu0 0
  %1184 = vmatpush1.bf16.xpose.msra.mxu0 %v1181
  %1185 = vmatprep.subr.bf16.mxu0 0
  %1186 = vmatpush1.bf16.xpose.msra.mxu0 0
  %1187 = vmatprep.subr.bf16.mxu0 0
  %1188 = vmatpush1.bf16.xpose.msra.mxu0 0
  %1189 = vmatprep.subr.bf16.mxu0 0
  %1190 = vmatpush1.bf16.xpose.msra.mxu0 0
  %1191 = vmatprep.subr.bf16.mxu0 0
  %1192 = vmatpush1.bf16.xpose.msra.mxu0 0
  %1193 = vmatprep.subr.bf16.mxu0 0
  %1194 = vmatpush1.bf16.xpose.msra.mxu0 0
  %1195 = vmatprep.subr.bf16.mxu0 0
  %1196 = vmatpush1.bf16.xpose.msra.mxu0 0
  %1197 = vmatprep.subr.bf16.mxu0 0
  %1198 = vmatpush1.bf16.xpose.msra.mxu0 0
  %1199 = vmatprep.subr.bf16.mxu0 0
  %1200 = vmatpush1.bf16.xpose.msra.mxu0 0
  %1201 = vmatprep.subr.bf16.mxu0 0
  %1202 = vmatpush1.bf16.xpose.msra.mxu0 0
  %1203 = vmatprep.subr.bf16.mxu0 0
  %1204 = vmatpush1.bf16.xpose.msra.mxu0 0
  %1205 = vmatprep.subr.bf16.mxu0 0
  %1206 = vmatpush1.bf16.xpose.msra.mxu0 0
  %1207 = vmatprep.subr.bf16.mxu0 0
  %1208 = vmatpush1.bf16.xpose.msra.mxu0 0
  %1209 = vmatprep.subr.bf16.mxu0 0
  %1210 = vmatpush1.bf16.xpose.msra.mxu0 0
  %1211 = vmatprep.subr.bf16.mxu0 0
  %1212 = vmatpush1.bf16.xpose.msra.mxu0 0
  %1213 = vmatprep.subr.bf16.mxu0 0
  %1214 = vmatpush1.bf16.xpose.msra.mxu0 0
  %1215 = vmatprep.mubr.bf16.mxu0 0
  %1216 = vmatmul.mubr.bf16.gmra.mrb[0].mxu0 %v1178
  %v1217 = vpop.f32.mrb[0].mxu0
  %v1218 = vadd.f32 0.0, %v1217
  %v1219 = vpop.f32.mrb[0].mxu0
  %v1220 = vpop.f32.mrb[0].mxu0
  %v1221 = vadd.f32 0.0, %v1220
  %v1222 = vpop.f32.mrb[0].mxu0
  %1223 = vdwg.mxu0
  %1224 = vrot.lane.b32.xlu0 %v1071, 104
  %v1225 = vpop.permute.xlu0 %1224
  %1226 = vrot.lane.b32.xlu0 %v1071, 72
  %v1227 = vpop.permute.xlu0 %1226
  %v1229 = vsel %vm172, %v1225, 0
  %v1232 = vsel %vm172, %v1227, 0
  %1234 = vmatprep.subr.bf16.mxu0 0
  %1235 = vmatpush1.bf16.xpose.msra.mxu0 %v1232
  %1236 = vmatprep.subr.bf16.mxu0 0
  %1237 = vmatpush1.bf16.xpose.msra.mxu0 0
  %1238 = vmatprep.subr.bf16.mxu0 0
  %1239 = vmatpush1.bf16.xpose.msra.mxu0 0
  %1240 = vmatprep.subr.bf16.mxu0 0
  %1241 = vmatpush1.bf16.xpose.msra.mxu0 0
  %1242 = vmatprep.subr.bf16.mxu0 0
  %1243 = vmatpush1.bf16.xpose.msra.mxu0 0
  %1244 = vmatprep.subr.bf16.mxu0 0
  %1245 = vmatpush1.bf16.xpose.msra.mxu0 0
  %1246 = vmatprep.subr.bf16.mxu0 0
  %1247 = vmatpush1.bf16.xpose.msra.mxu0 0
  %1248 = vmatprep.subr.bf16.mxu0 0
  %1249 = vmatpush1.bf16.xpose.msra.mxu0 0
  %1250 = vmatprep.subr.bf16.mxu0 0
  %1251 = vmatpush1.bf16.xpose.msra.mxu0 0
  %1252 = vmatprep.subr.bf16.mxu0 0
  %1253 = vmatpush1.bf16.xpose.msra.mxu0 0
  %1254 = vmatprep.subr.bf16.mxu0 0
  %1255 = vmatpush1.bf16.xpose.msra.mxu0 0
  %1256 = vmatprep.subr.bf16.mxu0 0
  %1257 = vmatpush1.bf16.xpose.msra.mxu0 0
  %1258 = vmatprep.subr.bf16.mxu0 0
  %1259 = vmatpush1.bf16.xpose.msra.mxu0 0
  %1260 = vmatprep.subr.bf16.mxu0 0
  %1261 = vmatpush1.bf16.xpose.msra.mxu0 0
  %1262 = vmatprep.subr.bf16.mxu0 0
  %1263 = vmatpush1.bf16.xpose.msra.mxu0 0
  %1264 = vmatprep.subr.bf16.mxu0 0
  %1265 = vmatpush1.bf16.xpose.msra.mxu0 0
  %1266 = vmatprep.mubr.bf16.mxu0 0
  %1267 = vmatmul.mubr.bf16.gmra.mrb[0].mxu0 %v1229
  %v1268 = vpop.f32.mrb[0].mxu0
  %v1269 = vadd.f32 0.0, %v1268
  %v1270 = vpop.f32.mrb[0].mxu0
  %v1271 = vpop.f32.mrb[0].mxu0
  %v1272 = vadd.f32 0.0, %v1271
  %v1273 = vpop.f32.mrb[0].mxu0
  %1274 = vdwg.mxu0
  %v1275 = vadd.f32 %v1116, %v84
  %v1276 = vadd.f32 %v1119, %v85
  %v1277 = vadd.f32 %v1167, %v84
  %v1278 = vadd.f32 %v1170, %v85
  %v1279 = vadd.f32 %v1218, %v84
  %v1280 = vadd.f32 %v1221, %v85
  %v1281 = vadd.f32 %v1269, %v84
  %v1282 = vadd.f32 %v1272, %v85
  %v1283 = vsel %vm381, %v1275, -inf
  %1284 = vmax.xlane.f32.xlu0 %v1283
  %v1285 = vpop.xlane.xlu0 %1284
  %v1286 = vsel %vm381, %v1276, -inf
  %1287 = vmax.xlane.f32.xlu0 %v1286
  %v1288 = vpop.xlane.xlu0 %1287
  %v1289 = vsel %vm381, %v1277, -inf
  %1290 = vmax.xlane.f32.xlu0 %v1289
  %v1291 = vpop.xlane.xlu0 %1290
  %v1292 = vsel %vm381, %v1278, -inf
  %1293 = vmax.xlane.f32.xlu0 %v1292
  %v1294 = vpop.xlane.xlu0 %1293
  %v1295 = vsel %vm381, %v1279, -inf
  %1296 = vmax.xlane.f32.xlu0 %v1295
  %v1297 = vpop.xlane.xlu0 %1296
  %v1298 = vsel %vm381, %v1280, -inf
  %1299 = vmax.xlane.f32.xlu0 %v1298
  %v1300 = vpop.xlane.xlu0 %1299
  %v1301 = vsel %vm381, %v1281, -inf
  %1302 = vmax.xlane.f32.xlu0 %v1301
  %v1303 = vpop.xlane.xlu0 %1302
  %v1304 = vsel %vm381, %v1282, -inf
  %1305 = vmax.xlane.f32.xlu0 %v1304
  %v1306 = vpop.xlane.xlu0 %1305
  %v1307 = vsub.f32 %v1275, %v1285
  %v1308 = vsub.f32 %v1276, %v1288
  %v1309 = vsub.f32 %v1277, %v1291
  %v1310 = vsub.f32 %v1278, %v1294
  %v1311 = vsub.f32 %v1279, %v1297
  %v1312 = vsub.f32 %v1280, %v1300
  %v1313 = vsub.f32 %v1281, %v1303
  %v1314 = vsub.f32 %v1282, %v1306
  %v1315 = vmul.f32 %v1307, 1.442695
  %v1316 = vpow.pop %v1315
  %v1317 = vmul.f32 %v1308, 1.442695
  %v1318 = vpow.pop %v1317
  %v1319 = vmul.f32 %v1309, 1.442695
  %v1320 = vpow.pop %v1319
  %v1321 = vmul.f32 %v1310, 1.442695
  %v1322 = vpow.pop %v1321
  %v1323 = vmul.f32 %v1311, 1.442695
  %v1324 = vpow.pop %v1323
  %v1325 = vmul.f32 %v1312, 1.442695
  %v1326 = vpow.pop %v1325
  %v1327 = vmul.f32 %v1313, 1.442695
  %v1328 = vpow.pop %v1327
  %v1329 = vmul.f32 %v1314, 1.442695
  %v1330 = vpow.pop %v1329
  %v1331 = vsel %vm381, %v1316, 0.0
  %1332 = vadd.xlane.f32.xlu0 %v1331
  %v1333 = vpop.xlane.xlu0 %1332
  %v1334 = vsel %vm381, %v1318, 0.0
  %1335 = vadd.xlane.f32.xlu0 %v1334
  %v1336 = vpop.xlane.xlu0 %1335
  %v1337 = vsel %vm381, %v1320, 0.0
  %1338 = vadd.xlane.f32.xlu0 %v1337
  %v1339 = vpop.xlane.xlu0 %1338
  %v1340 = vsel %vm381, %v1322, 0.0
  %1341 = vadd.xlane.f32.xlu0 %v1340
  %v1342 = vpop.xlane.xlu0 %1341
  %v1343 = vsel %vm381, %v1324, 0.0
  %1344 = vadd.xlane.f32.xlu0 %v1343
  %v1345 = vpop.xlane.xlu0 %1344
  %v1346 = vsel %vm381, %v1326, 0.0
  %1347 = vadd.xlane.f32.xlu0 %v1346
  %v1348 = vpop.xlane.xlu0 %1347
  %v1349 = vsel %vm381, %v1328, 0.0
  %1350 = vadd.xlane.f32.xlu0 %v1349
  %v1351 = vpop.xlane.xlu0 %1350
  %v1352 = vsel %vm381, %v1330, 0.0
  %1353 = vadd.xlane.f32.xlu0 %v1352
  %v1354 = vpop.xlane.xlu0 %1353
  %v1355 = vrcp.pop %v1333
  %v1356 = vrcp.pop %v1336
  %v1357 = vrcp.pop %v1339
  %v1358 = vrcp.pop %v1342
  %v1359 = vrcp.pop %v1345
  %v1360 = vrcp.pop %v1348
  %v1361 = vrcp.pop %v1351
  %v1362 = vrcp.pop %v1354
  %v1363 = vmul.f32 %v1316, %v1355
  %v1364 = vmul.f32 %v1318, %v1356
  %v1365 = vmul.f32 %v1320, %v1357
  %v1366 = vmul.f32 %v1322, %v1358
  %v1367 = vmul.f32 %v1324, %v1359
  %v1368 = vmul.f32 %v1326, %v1360
  %v1369 = vmul.f32 %v1328, %v1361
  %v1370 = vmul.f32 %v1330, %v1362
  %v1371 = vpack.c.bf16 %v1364, %v1363
  %1372 = vrot.lane.b32.xlu0 %v1071, 64
  %v1373 = vpop.permute.xlu0 %1372
  %v1376 = vsel %vm381, %v1371, 0
  %1378 = vmatprep.subr.bf16.mxu0 0
  %1379 = vmatpush1.bf16.msra.mxu0 %v1373
  %1380 = vmatprep.subr.bf16.mxu0 0
  %1381 = vmatpush1.bf16.msra.mxu0 0
  %1382 = vmatprep.subr.bf16.mxu0 0
  %1383 = vmatpush1.bf16.msra.mxu0 0
  %1384 = vmatprep.subr.bf16.mxu0 0
  %1385 = vmatpush1.bf16.msra.mxu0 0
  %1386 = vmatprep.subr.bf16.mxu0 0
  %1387 = vmatpush1.bf16.msra.mxu0 0
  %1388 = vmatprep.subr.bf16.mxu0 0
  %1389 = vmatpush1.bf16.msra.mxu0 0
  %1390 = vmatprep.subr.bf16.mxu0 0
  %1391 = vmatpush1.bf16.msra.mxu0 0
  %1392 = vmatprep.subr.bf16.mxu0 0
  %1393 = vmatpush1.bf16.msra.mxu0 0
  %1394 = vmatprep.subr.bf16.mxu0 0
  %1395 = vmatpush1.bf16.msra.mxu0 0
  %1396 = vmatprep.subr.bf16.mxu0 0
  %1397 = vmatpush1.bf16.msra.mxu0 0
  %1398 = vmatprep.subr.bf16.mxu0 0
  %1399 = vmatpush1.bf16.msra.mxu0 0
  %1400 = vmatprep.subr.bf16.mxu0 0
  %1401 = vmatpush1.bf16.msra.mxu0 0
  %1402 = vmatprep.subr.bf16.mxu0 0
  %1403 = vmatpush1.bf16.msra.mxu0 0
  %1404 = vmatprep.subr.bf16.mxu0 0
  %1405 = vmatpush1.bf16.msra.mxu0 0
  %1406 = vmatprep.subr.bf16.mxu0 0
  %1407 = vmatpush1.bf16.msra.mxu0 0
  %1408 = vmatprep.subr.bf16.mxu0 0
  %1409 = vmatpush1.bf16.msra.mxu0 0
  %1410 = vmatprep.mubr.bf16.mxu0 0
  %1411 = vmatmul.mubr.bf16.gmra.mrb[0].mxu0 %v1376
  %v1412 = vpop.f32.mrb[0].mxu0
  %v1413 = vadd.f32 0.0, %v1412
  %v1414 = vpop.f32.mrb[0].mxu0
  %v1415 = vpop.f32.mrb[0].mxu0
  %v1416 = vadd.f32 0.0, %v1415
  %v1417 = vpop.f32.mrb[0].mxu0
  %1418 = vdwg.mxu0
  %v1419 = vpack.c.bf16 %v1366, %v1365
  %1420 = vrot.lane.b32.xlu0 %v1071, 56
  %v1421 = vpop.permute.xlu0 %1420
  %v1424 = vsel %vm381, %v1419, 0
  %1426 = vmatprep.subr.bf16.mxu0 0
  %1427 = vmatpush1.bf16.msra.mxu0 %v1421
  %1428 = vmatprep.subr.bf16.mxu0 0
  %1429 = vmatpush1.bf16.msra.mxu0 0
  %1430 = vmatprep.subr.bf16.mxu0 0
  %1431 = vmatpush1.bf16.msra.mxu0 0
  %1432 = vmatprep.subr.bf16.mxu0 0
  %1433 = vmatpush1.bf16.msra.mxu0 0
  %1434 = vmatprep.subr.bf16.mxu0 0
  %1435 = vmatpush1.bf16.msra.mxu0 0
  %1436 = vmatprep.subr.bf16.mxu0 0
  %1437 = vmatpush1.bf16.msra.mxu0 0
  %1438 = vmatprep.subr.bf16.mxu0 0
  %1439 = vmatpush1.bf16.msra.mxu0 0
  %1440 = vmatprep.subr.bf16.mxu0 0
  %1441 = vmatpush1.bf16.msra.mxu0 0
  %1442 = vmatprep.subr.bf16.mxu0 0
  %1443 = vmatpush1.bf16.msra.mxu0 0
  %1444 = vmatprep.subr.bf16.mxu0 0
  %1445 = vmatpush1.bf16.msra.mxu0 0
  %1446 = vmatprep.subr.bf16.mxu0 0
  %1447 = vmatpush1.bf16.msra.mxu0 0
  %1448 = vmatprep.subr.bf16.mxu0 0
  %1449 = vmatpush1.bf16.msra.mxu0 0
  %1450 = vmatprep.subr.bf16.mxu0 0
  %1451 = vmatpush1.bf16.msra.mxu0 0
  %1452 = vmatprep.subr.bf16.mxu0 0
  %1453 = vmatpush1.bf16.msra.mxu0 0
  %1454 = vmatprep.subr.bf16.mxu0 0
  %1455 = vmatpush1.bf16.msra.mxu0 0
  %1456 = vmatprep.subr.bf16.mxu0 0
  %1457 = vmatpush1.bf16.msra.mxu0 0
  %1458 = vmatprep.mubr.bf16.mxu0 0
  %1459 = vmatmul.mubr.bf16.gmra.mrb[0].mxu0 %v1424
  %v1460 = vpop.f32.mrb[0].mxu0
  %v1461 = vadd.f32 0.0, %v1460
  %v1462 = vpop.f32.mrb[0].mxu0
  %v1463 = vpop.f32.mrb[0].mxu0
  %v1464 = vadd.f32 0.0, %v1463
  %v1465 = vpop.f32.mrb[0].mxu0
  %1466 = vdwg.mxu0
  %v1467 = vpack.c.bf16 %v1368, %v1367
  %1468 = vrot.lane.b32.xlu0 %v1071, 48
  %v1469 = vpop.permute.xlu0 %1468
  %v1472 = vsel %vm381, %v1467, 0
  %1474 = vmatprep.subr.bf16.mxu0 0
  %1475 = vmatpush1.bf16.msra.mxu0 %v1469
  %1476 = vmatprep.subr.bf16.mxu0 0
  %1477 = vmatpush1.bf16.msra.mxu0 0
  %1478 = vmatprep.subr.bf16.mxu0 0
  %1479 = vmatpush1.bf16.msra.mxu0 0
  %1480 = vmatprep.subr.bf16.mxu0 0
  %1481 = vmatpush1.bf16.msra.mxu0 0
  %1482 = vmatprep.subr.bf16.mxu0 0
  %1483 = vmatpush1.bf16.msra.mxu0 0
  %1484 = vmatprep.subr.bf16.mxu0 0
  %1485 = vmatpush1.bf16.msra.mxu0 0
  %1486 = vmatprep.subr.bf16.mxu0 0
  %1487 = vmatpush1.bf16.msra.mxu0 0
  %1488 = vmatprep.subr.bf16.mxu0 0
  %1489 = vmatpush1.bf16.msra.mxu0 0
  %1490 = vmatprep.subr.bf16.mxu0 0
  %1491 = vmatpush1.bf16.msra.mxu0 0
  %1492 = vmatprep.subr.bf16.mxu0 0
  %1493 = vmatpush1.bf16.msra.mxu0 0
  %1494 = vmatprep.subr.bf16.mxu0 0
  %1495 = vmatpush1.bf16.msra.mxu0 0
  %1496 = vmatprep.subr.bf16.mxu0 0
  %1497 = vmatpush1.bf16.msra.mxu0 0
  %1498 = vmatprep.subr.bf16.mxu0 0
  %1499 = vmatpush1.bf16.msra.mxu0 0
  %1500 = vmatprep.subr.bf16.mxu0 0
  %1501 = vmatpush1.bf16.msra.mxu0 0
  %1502 = vmatprep.subr.bf16.mxu0 0
  %1503 = vmatpush1.bf16.msra.mxu0 0
  %1504 = vmatprep.subr.bf16.mxu0 0
  %1505 = vmatpush1.bf16.msra.mxu0 0
  %1506 = vmatprep.mubr.bf16.mxu0 0
  %1507 = vmatmul.mubr.bf16.gmra.mrb[0].mxu0 %v1472
  %v1508 = vpop.f32.mrb[0].mxu0
  %v1509 = vadd.f32 0.0, %v1508
  %v1510 = vpop.f32.mrb[0].mxu0
  %v1511 = vpop.f32.mrb[0].mxu0
  %v1512 = vadd.f32 0.0, %v1511
  %v1513 = vpop.f32.mrb[0].mxu0
  %1514 = vdwg.mxu0
  %v1515 = vpack.c.bf16 %v1370, %v1369
  %1516 = vrot.lane.b32.xlu0 %v1071, 40
  %v1517 = vpop.permute.xlu0 %1516
  %v1520 = vsel %vm381, %v1515, 0
  %1522 = vmatprep.subr.bf16.mxu0 0
  %1523 = vmatpush1.bf16.msra.mxu0 %v1517
  %1524 = vmatprep.subr.bf16.mxu0 0
  %1525 = vmatpush1.bf16.msra.mxu0 0
  %1526 = vmatprep.subr.bf16.mxu0 0
  %1527 = vmatpush1.bf16.msra.mxu0 0
  %1528 = vmatprep.subr.bf16.mxu0 0
  %1529 = vmatpush1.bf16.msra.mxu0 0
  %1530 = vmatprep.subr.bf16.mxu0 0
  %1531 = vmatpush1.bf16.msra.mxu0 0
  %1532 = vmatprep.subr.bf16.mxu0 0
  %1533 = vmatpush1.bf16.msra.mxu0 0
  %1534 = vmatprep.subr.bf16.mxu0 0
  %1535 = vmatpush1.bf16.msra.mxu0 0
  %1536 = vmatprep.subr.bf16.mxu0 0
  %1537 = vmatpush1.bf16.msra.mxu0 0
  %1538 = vmatprep.subr.bf16.mxu0 0
  %1539 = vmatpush1.bf16.msra.mxu0 0
  %1540 = vmatprep.subr.bf16.mxu0 0
  %1541 = vmatpush1.bf16.msra.mxu0 0
  %1542 = vmatprep.subr.bf16.mxu0 0
  %1543 = vmatpush1.bf16.msra.mxu0 0
  %1544 = vmatprep.subr.bf16.mxu0 0
  %1545 = vmatpush1.bf16.msra.mxu0 0
  %1546 = vmatprep.subr.bf16.mxu0 0
  %1547 = vmatpush1.bf16.msra.mxu0 0
  %1548 = vmatprep.subr.bf16.mxu0 0
  %1549 = vmatpush1.bf16.msra.mxu0 0
  %1550 = vmatprep.subr.bf16.mxu0 0
  %1551 = vmatpush1.bf16.msra.mxu0 0
  %1552 = vmatprep.subr.bf16.mxu0 0
  %1553 = vmatpush1.bf16.msra.mxu0 0
  %1554 = vmatprep.mubr.bf16.mxu0 0
  %1555 = vmatmul.mubr.bf16.gmra.mrb[0].mxu0 %v1520
  %v1556 = vpop.f32.mrb[0].mxu0
  %v1557 = vadd.f32 0.0, %v1556
  %v1558 = vpop.f32.mrb[0].mxu0
  %v1559 = vpop.f32.mrb[0].mxu0
  %v1560 = vadd.f32 0.0, %v1559
  %v1561 = vpop.f32.mrb[0].mxu0
  %1562 = vdwg.mxu0
  %1565 = vrot.lane.b32.xlu0 %v1461, 8
  %v1566 = vpop.permute.xlu0 %1565
  %1567 = vrot.lane.b32.xlu0 %v1464, 8
  %v1568 = vpop.permute.xlu0 %1567
  %1573 = vrot.lane.b32.xlu0 %v1509, 16
  %v1574 = vpop.permute.xlu0 %1573
  %1575 = vrot.lane.b32.xlu0 %v1512, 16
  %v1576 = vpop.permute.xlu0 %1575
  %1581 = vrot.lane.b32.xlu0 %v1557, 24
  %v1582 = vpop.permute.xlu0 %1581
  %1583 = vrot.lane.b32.xlu0 %v1560, 24
  %v1584 = vpop.permute.xlu0 %1583
  %v1587 = vsel %vm172, %v1413, %v1566
  %v1588 = vsel %vm172, %v1416, %v1568
  %v1589 = vsel %vm381, %v1587, %v1574
  %v1590 = vsel %vm381, %v1588, %v1576
  %v1591 = vsel %vm690, %v1589, %v1582
  %v1592 = vsel %vm690, %v1590, %v1584
  %v1593 = vpack.c.bf16 %v1592, %v1591
  %v1594 = vlaneseq
  %v1595 = vshrl.u32 %v1594, 7
  %v1596 = vsub.s32 0, %v1595
  %v1597 = vrot.slane %v984, %v1596
  %1598 = vrot.lane.b32.xlu0 %v1023, 32
  %v1599 = vpop.permute.xlu0 %1598
  %1600 = vrot.lane.b32.xlu0 %v1024, 32
  %v1601 = vpop.permute.xlu0 %1600
  %v1605 = vsel %vm44, %v1593, 0
  %1607 = vmatprep.subr.bf16.mxu0 0
  %1608 = vmatpush1.bf16.msra.mxu0 %v1599
  %1609 = vmatprep.subr.bf16.mxu0 0
  %1610 = vmatpush1.bf16.msra.mxu0 %v1601
  %1611 = vmatprep.subr.bf16.mxu0 0
  %1612 = vmatpush1.bf16.msra.mxu0 0
  %1613 = vmatprep.subr.bf16.mxu0 0
  %1614 = vmatpush1.bf16.msra.mxu0 0
  %1615 = vmatprep.subr.bf16.mxu0 0
  %1616 = vmatpush1.bf16.msra.mxu0 0
  %1617 = vmatprep.subr.bf16.mxu0 0
  %1618 = vmatpush1.bf16.msra.mxu0 0
  %1619 = vmatprep.subr.bf16.mxu0 0
  %1620 = vmatpush1.bf16.msra.mxu0 0
  %1621 = vmatprep.subr.bf16.mxu0 0
  %1622 = vmatpush1.bf16.msra.mxu0 0
  %1623 = vmatprep.subr.bf16.mxu0 0
  %1624 = vmatpush1.bf16.msra.mxu0 0
  %1625 = vmatprep.subr.bf16.mxu0 0
  %1626 = vmatpush1.bf16.msra.mxu0 0
  %1627 = vmatprep.subr.bf16.mxu0 0
  %1628 = vmatpush1.bf16.msra.mxu0 0
  %1629 = vmatprep.subr.bf16.mxu0 0
  %1630 = vmatpush1.bf16.msra.mxu0 0
  %1631 = vmatprep.subr.bf16.mxu0 0
  %1632 = vmatpush1.bf16.msra.mxu0 0
  %1633 = vmatprep.subr.bf16.mxu0 0
  %1634 = vmatpush1.bf16.msra.mxu0 0
  %1635 = vmatprep.subr.bf16.mxu0 0
  %1636 = vmatpush1.bf16.msra.mxu0 0
  %1637 = vmatprep.subr.bf16.mxu0 0
  %1638 = vmatpush1.bf16.msra.mxu0 0
  %1639 = vmatprep.mubr.bf16.mxu0 0
  %1640 = vmatmul.mubr.bf16.gmra.mrb[0].mxu0 %v1605
  %v1641 = vpop.f32.mrb[0].mxu0
  %v1642 = vadd.f32 %v1597, %v1641
  %v1643 = vpop.f32.mrb[0].mxu0
  %v1644 = vpop.f32.mrb[0].mxu0
  %v1645 = vadd.f32 %v1597, %v1644
  %v1646 = vpop.f32.mrb[0].mxu0
  %1647 = vdwg.mxu0
  %v1648 = vadd.f32 %v981, %v1642
  %v1649 = vadd.f32 %v982, %v1645
  %v1650 = vsel %vm44, %v1648, 0.0
  %1651 = vadd.xlane.f32.xlu0 %v1650
  %v1652 = vpop.xlane.xlu0 %1651
  %v1653 = vsel %vm44, %v1649, 0.0
  %1654 = vadd.xlane.f32.xlu0 %v1653
  %v1655 = vpop.xlane.xlu0 %1654
  %v1656 = vmul.f32 %v1652, %v51
  %v1657 = vmul.f32 %v1655, %v51
  %v1658 = vsub.f32 %v1648, %v1656
  %v1659 = vsub.f32 %v1649, %v1657
  %v1660 = vmul.f32 %v1658, %v1658
  %v1661 = vmul.f32 %v1659, %v1659
  %v1662 = vsel %vm44, %v1660, 0.0
  %1663 = vadd.xlane.f32.xlu0 %v1662
  %v1664 = vpop.xlane.xlu0 %1663
  %v1665 = vsel %vm44, %v1661, 0.0
  %1666 = vadd.xlane.f32.xlu0 %v1665
  %v1667 = vpop.xlane.xlu0 %1666
  %v1668 = vmul.f32 %v1664, %v51
  %v1669 = vmul.f32 %v1667, %v51
  %v1670 = vadd.f32 %v1668, 1e-12
  %v1671 = vadd.f32 %v1669, 1e-12
  %v1672 = vrsqrt.pop %v1670
  %v1673 = vrsqrt.pop %v1671
  %v1674 = vmul.f32 %v1658, %v1672
  %v1675 = vmul.f32 %v1659, %v1673
  %v1676 = vlaneseq
  %v1677 = vshrl.u32 %v1676, 7
  %v1678 = vsub.s32 1, %v1677
  %v1679 = vrot.slane %v984, %v1678
  %v1680 = vmul.f32 %v1674, %v1679
  %v1681 = vmul.f32 %v1675, %v1679
  %v1682 = vlaneseq
  %v1683 = vshrl.u32 %v1682, 7
  %v1684 = vsub.s32 2, %v1683
  %v1685 = vrot.slane %v984, %v1684
  %v1686 = vadd.f32 %v1680, %v1685
  %v1687 = vadd.f32 %v1681, %v1685
  %v1688 = vpack.c.bf16 %v1687, %v1686
  %v1690 = vlaneseq
  %v1691 = vshrl.u32 %v1690, 7
  %v1692 = vsub.s32 0, %v1691
  %v1693 = vrot.slane %v993, %v1692
  %v1699 = vunpack.c.l.b16 %v995
  %v1700 = vunpack.c.l.b16 %v996
  %v1701 = vunpack.c.l.b16 %v997
  %v1702 = vunpack.c.l.b16 %v998
  %v1703 = vpack.c.b16 %v1700, %v1699
  %v1704 = vpack.c.b16 %v1702, %v1701
  %v1708 = vsel %vm44, %v1688, 0
  %1710 = vmatprep.subr.bf16.mxu0 0
  %1711 = vmatpush1.bf16.msra.mxu0 %v1703
  %1712 = vmatprep.subr.bf16.mxu0 0
  %1713 = vmatpush1.bf16.msra.mxu0 %v1704
  %1714 = vmatprep.subr.bf16.mxu0 0
  %1715 = vmatpush1.bf16.msra.mxu0 0
  %1716 = vmatprep.subr.bf16.mxu0 0
  %1717 = vmatpush1.bf16.msra.mxu0 0
  %1718 = vmatprep.subr.bf16.mxu0 0
  %1719 = vmatpush1.bf16.msra.mxu0 0
  %1720 = vmatprep.subr.bf16.mxu0 0
  %1721 = vmatpush1.bf16.msra.mxu0 0
  %1722 = vmatprep.subr.bf16.mxu0 0
  %1723 = vmatpush1.bf16.msra.mxu0 0
  %1724 = vmatprep.subr.bf16.mxu0 0
  %1725 = vmatpush1.bf16.msra.mxu0 0
  %1726 = vmatprep.subr.bf16.mxu0 0
  %1727 = vmatpush1.bf16.msra.mxu0 0
  %1728 = vmatprep.subr.bf16.mxu0 0
  %1729 = vmatpush1.bf16.msra.mxu0 0
  %1730 = vmatprep.subr.bf16.mxu0 0
  %1731 = vmatpush1.bf16.msra.mxu0 0
  %1732 = vmatprep.subr.bf16.mxu0 0
  %1733 = vmatpush1.bf16.msra.mxu0 0
  %1734 = vmatprep.subr.bf16.mxu0 0
  %1735 = vmatpush1.bf16.msra.mxu0 0
  %1736 = vmatprep.subr.bf16.mxu0 0
  %1737 = vmatpush1.bf16.msra.mxu0 0
  %1738 = vmatprep.subr.bf16.mxu0 0
  %1739 = vmatpush1.bf16.msra.mxu0 0
  %1740 = vmatprep.subr.bf16.mxu0 0
  %1741 = vmatpush1.bf16.msra.mxu0 0
  %1742 = vmatprep.mubr.bf16.mxu0 0
  %1743 = vmatmul.mubr.bf16.gmra.mrb[0].mxu0 %v1708
  %v1744 = vpop.f32.mrb[0].mxu0
  %v1745 = vadd.f32 %v1693, %v1744
  %v1746 = vpop.f32.mrb[0].mxu0
  %v1747 = vpop.f32.mrb[0].mxu0
  %v1748 = vadd.f32 %v1693, %v1747
  %v1749 = vpop.f32.mrb[0].mxu0
  %1750 = vdwg.mxu0
  %v1751 = vmul.f32 %v1745, 0.5
  %v1752 = vmul.f32 %v1748, 0.5
  %v1753 = vmul.f32 %v1745, 0.044715
  %v1754 = vmul.f32 %v1748, 0.044715
  %v1755 = vmul.f32 %v1753, %v1745
  %v1756 = vmul.f32 %v1754, %v1748
  %v1757 = vmul.f32 %v1755, %v1745
  %v1758 = vmul.f32 %v1756, %v1748
  %v1759 = vadd.f32 %v1745, %v1757
  %v1760 = vadd.f32 %v1748, %v1758
  %v1761 = vmul.f32 %v1759, 0.7978846
  %v1762 = vmul.f32 %v1760, 0.7978846
  %v1763 = vtanh.pop %v1761
  %v1764 = vtanh.pop %v1762
  %v1765 = vadd.f32 %v1763, 1.0
  %v1766 = vadd.f32 %v1764, 1.0
  %v1767 = vmul.f32 %v1751, %v1765
  %v1768 = vmul.f32 %v1752, %v1766
  %v1769 = vpack.c.bf16 %v1768, %v1767
  %v1770 = vlaneseq
  %v1771 = vshrl.u32 %v1770, 7
  %v1772 = vsub.s32 3, %v1771
  %v1773 = vrot.slane %v984, %v1772
  %v1782 = vunpack.c.l.b16 %v1000
  %v1783 = vunpack.c.l.b16 %v1001
  %v1784 = vunpack.c.l.b16 %v1002
  %v1785 = vunpack.c.l.b16 %v1003
  %v1786 = vunpack.c.l.b16 %v1004
  %v1787 = vunpack.c.l.b16 %v1005
  %v1788 = vunpack.c.l.b16 %v1006
  %v1789 = vunpack.c.l.b16 %v1007
  %v1790 = vpack.c.b16 %v1783, %v1782
  %v1791 = vpack.c.b16 %v1785, %v1784
  %v1792 = vpack.c.b16 %v1787, %v1786
  %v1793 = vpack.c.b16 %v1789, %v1788
  %v1799 = vsel %vm898, %v1769, 0
  %1801 = vmatprep.subr.bf16.mxu0 0
  %1802 = vmatpush1.bf16.msra.mxu0 %v1790
  %1803 = vmatprep.subr.bf16.mxu0 0
  %1804 = vmatpush1.bf16.msra.mxu0 %v1791
  %1805 = vmatprep.subr.bf16.mxu0 0
  %1806 = vmatpush1.bf16.msra.mxu0 %v1792
  %1807 = vmatprep.subr.bf16.mxu0 0
  %1808 = vmatpush1.bf16.msra.mxu0 %v1793
  %1809 = vmatprep.subr.bf16.mxu0 0
  %1810 = vmatpush1.bf16.msra.mxu0 0
  %1811 = vmatprep.subr.bf16.mxu0 0
  %1812 = vmatpush1.bf16.msra.mxu0 0
  %1813 = vmatprep.subr.bf16.mxu0 0
  %1814 = vmatpush1.bf16.msra.mxu0 0
  %1815 = vmatprep.subr.bf16.mxu0 0
  %1816 = vmatpush1.bf16.msra.mxu0 0
  %1817 = vmatprep.subr.bf16.mxu0 0
  %1818 = vmatpush1.bf16.msra.mxu0 0
  %1819 = vmatprep.subr.bf16.mxu0 0
  %1820 = vmatpush1.bf16.msra.mxu0 0
  %1821 = vmatprep.subr.bf16.mxu0 0
  %1822 = vmatpush1.bf16.msra.mxu0 0
  %1823 = vmatprep.subr.bf16.mxu0 0
  %1824 = vmatpush1.bf16.msra.mxu0 0
  %1825 = vmatprep.subr.bf16.mxu0 0
  %1826 = vmatpush1.bf16.msra.mxu0 0
  %1827 = vmatprep.subr.bf16.mxu0 0
  %1828 = vmatpush1.bf16.msra.mxu0 0
  %1829 = vmatprep.subr.bf16.mxu0 0
  %1830 = vmatpush1.bf16.msra.mxu0 0
  %1831 = vmatprep.subr.bf16.mxu0 0
  %1832 = vmatpush1.bf16.msra.mxu0 0
  %1833 = vmatprep.mubr.bf16.mxu0 0
  %1834 = vmatmul.mubr.bf16.gmra.mrb[0].mxu0 %v1799
  %v1835 = vpop.f32.mrb[0].mxu0
  %v1836 = vadd.f32 %v1773, %v1835
  %v1837 = vpop.f32.mrb[0].mxu0
  %v1838 = vpop.f32.mrb[0].mxu0
  %v1839 = vadd.f32 %v1773, %v1838
  %v1840 = vpop.f32.mrb[0].mxu0
  %1841 = vdwg.mxu0
  %v1842 = vadd.f32 %v1686, %v1836
  %v1843 = vadd.f32 %v1687, %v1839
  %v1844 = vsel %vm44, %v1842, 0.0
  %1845 = vadd.xlane.f32.xlu0 %v1844
  %v1846 = vpop.xlane.xlu0 %1845
  %v1847 = vsel %vm44, %v1843, 0.0
  %1848 = vadd.xlane.f32.xlu0 %v1847
  %v1849 = vpop.xlane.xlu0 %1848
  %v1850 = vmul.f32 %v1846, %v51
  %v1851 = vmul.f32 %v1849, %v51
  %v1852 = vsub.f32 %v1842, %v1850
  %v1853 = vsub.f32 %v1843, %v1851
  %v1854 = vmul.f32 %v1852, %v1852
  %v1855 = vmul.f32 %v1853, %v1853
  %v1856 = vsel %vm44, %v1854, 0.0
  %1857 = vadd.xlane.f32.xlu0 %v1856
  %v1858 = vpop.xlane.xlu0 %1857
  %v1859 = vsel %vm44, %v1855, 0.0
  %1860 = vadd.xlane.f32.xlu0 %v1859
  %v1861 = vpop.xlane.xlu0 %1860
  %v1862 = vmul.f32 %v1858, %v51
  %v1863 = vmul.f32 %v1861, %v51
  %v1864 = vadd.f32 %v1862, 1e-12
  %v1865 = vadd.f32 %v1863, 1e-12
  %v1866 = vrsqrt.pop %v1864
  %v1867 = vrsqrt.pop %v1865
  %v1868 = vmul.f32 %v1852, %v1866
  %v1869 = vmul.f32 %v1853, %v1867
  %v1870 = vlaneseq
  %v1871 = vshrl.u32 %v1870, 7
  %v1872 = vsub.s32 4, %v1871
  %v1873 = vrot.slane %v984, %v1872
  %v1874 = vmul.f32 %v1868, %v1873
  %v1875 = vmul.f32 %v1869, %v1873
  %v1876 = vlaneseq
  %v1877 = vshrl.u32 %v1876, 7
  %v1878 = vsub.s32 5, %v1877
  %v1879 = vrot.slane %v984, %v1878
  %v1880 = vadd.f32 %v1874, %v1879
  %v1881 = vadd.f32 %v1875, %v1879
  %v1882 = vld [vmem:[%s9] sm:$0x1]
  %v1883 = vld [vmem:[#allocation2] sm:$0x1]
  %v1885 = vrot.slane %v1881, 7
  %vm1887 = vcmask 1040384
  %v1888 = vsel %vm1887, %v1880, %v1885
  %v1890 = vlaneseq
  %v1891 = vshrl.u32 %v1890, 7
  %v1892 = vsub.s32 0, %v1891
  %v1893 = vrot.slane %v1882, %v1892
  %v1895 = vmul.f32 %v1888, %v1893
  %vm1896 = vcmask 254976
  %v1897 = vsel %vm1896, %v1895, 0.0
  %1898 = vadd.xlane.f32.xlu0 %v1897
  %v1899 = vpop.xlane.xlu0 %1898
  %v1901 = vlaneseq
  %v1902 = vshrl.u32 %v1901, 7
  %v1903 = vsub.s32 0, %v1902
  %v1904 = vrot.slane %v1883, %v1903
  %v1906 = vadd.f32 %v1899, %v1904
  %1908 = vset.pattern.permute.xlu0 0
  %1909 = vperm.xlu0 %1908, %v1906
  %v1910 = vpop.permute.xlu0 %1909
  %1912 = vst [vmem:[%s11] sm:$0x3] %v1910
  // Predicated region
  $region46: #{model_forward.1} parent=0 // pred_check
    _
  $region47: #{model_forward.1} parent=0 // pred_check_branch
    %1914 = sbr.rel (0) target = $region49
  $region48: #{model_forward.1} parent=0 // pred_region
    _
  $region49: #{model_forward.1} parent=0 // pred_fallthru
    _
  // Predicated region
  $region50: #{model_forward.1} parent=0 // pred_check
    _
  $region51: #{model_forward.1} parent=0 // pred_check_branch
    %1916 = sbr.rel (0) target = $region53
  $region52: #{model_forward.1} parent=0 // pred_region
    _
  $region53: #{model_forward.1} parent=0 // pred_fallthru
    _

</llo_original>
